<compile_context>
chip_gen: v7x
topology: tpu7x:2x2x1
jax: 0.10.0
libtpu: 0.0.40
codegen_flags: <defaults>
</compile_context>

<pallas_src>
import jax
import jax.numpy as jnp
from jax.experimental import pallas as pl
from jax.experimental.pallas import tpu as pltpu

QUERY_HEADS = 4
KV_HEADS = 2
DIM_HEAD = 16                                # dim_head % 8 == 0, <= 128
EMBED_DIM = QUERY_HEADS * DIM_HEAD           # 64
KV_EMBED_DIM = KV_HEADS * DIM_HEAD           # 32
GROUPS = QUERY_HEADS // KV_HEADS             # 2
LN_EPS = 1e-5

LANE = 128                                   # vreg lane width
NUM_SEGS = 3 * KV_HEADS                      # [q_h0|q_h1|k_h0|k_h1|v_h0|v_h1]
QKV_PAD = NUM_SEGS * LANE                    # 768 padded fused-QKV columns
OUT_PAD = LANE                               # padded fc_out columns (>= EMBED_DIM)


def _layer_norm(x, gamma, beta, eps):
    mu = jnp.mean(x, axis=-1, keepdims=True)
    var = jnp.mean((x - mu) ** 2, axis=-1, keepdims=True)
    return (x - mu) * jax.lax.rsqrt(var + eps) * gamma + beta


def gqa_kernel(x_ref, wqkv_ref, bqkv_ref, wo_ref, bo_ref,
               g_attn_ref, b_attn_ref, g_ln_ref, b_ln_ref, o_ref):
    """One grid step = one batch element (N rows); kv-heads batched in one dot each."""
    x = x_ref[...].astype(jnp.float32)                               # (N, E)
    xn = _layer_norm(x, g_attn_ref[...], b_attn_ref[...], LN_EPS)    # attn_norm

    # Single fused MXU matmul.  Column layout: [q_h0|q_h1|k_h0|k_h1|v_h0|v_h1], every
    # segment zero-padded to a 128-lane boundary -> head slices below are aligned views.
    qkv = jnp.dot(xn, wqkv_ref[...],
                  preferred_element_type=jnp.float32) + bqkv_ref[...]   # (N, 6*128)

    def heads(tensor_idx):
        # (H, N, D): lane-aligned per-head slices stacked along a new leading batch axis.
        return jnp.stack(
            [qkv[:, (tensor_idx * KV_HEADS + h) * LANE:
                    (tensor_idx * KV_HEADS + h) * LANE + DIM_HEAD]
             for h in range(KV_HEADS)], axis=0)

    q3, k3, v3 = heads(0), heads(1), heads(2)     # q is pre-grouped & pre-scaled

    # Batched q @ k^T over all kv-heads at once; contracts the last dims (no .T).
    sim = jnp.einsum('hnd,hsd->hns', q3, k3,
                     preferred_element_type=jnp.float32)             # (H, N, S)

    # softmax_one exactly as the module's SoftmaxOne: exp(x-m) / (1 + sum(exp(x-m))).
    m = jnp.max(sim, axis=-1, keepdims=True)
    e = jnp.exp(sim - m)
    p = e / (1.0 + jnp.sum(e, axis=-1, keepdims=True))               # exact divide
    # TODO(synk): nn.Dropout on the attention weights is eval-mode identity here.

    att3 = jnp.einsum('hns,hsd->hnd', p, v3,
                      preferred_element_type=jnp.float32)            # (H, N, D)

    # 'b h n d -> b n (h d)' assembled in vregs with one lane concat (no scratch).
    att = jnp.concatenate([att3[h] for h in range(KV_HEADS)], axis=-1)   # (N, KV_E)
    att = _layer_norm(att, g_ln_ref[...], b_ln_ref[...], LN_EPS)

    # fc_out padded to 128 output lanes -> unmasked full-vreg store.
    out = jnp.dot(att, wo_ref[...], preferred_element_type=jnp.float32) + bo_ref[...]
    o_ref[...] = out.astype(o_ref.dtype)


def fuse_params(raw):
    """Wrapper-side algebra + layout plumbing (zero in-kernel cost)."""
    (wq, bq, wk, bk, wv, bv, wo, bo, g_attn, b_attn, g_ln, b_ln) = raw
    scale = DIM_HEAD ** (-0.5)
    # torch Linear weight is (out, in); transpose to (in, out) for x @ W.
    # Fold the group-sum over query heads (query head = h_kv*GROUPS + g) and the
    # 1/sqrt(d) similarity scale into the query weight/bias.
    wq_g = wq.T.reshape(EMBED_DIM, KV_HEADS, GROUPS, DIM_HEAD).sum(axis=2) * scale
    bq_g = bq.reshape(KV_HEADS, GROUPS, DIM_HEAD).sum(axis=1) * scale
    wk_h = wk.T.reshape(EMBED_DIM, KV_HEADS, DIM_HEAD)
    wv_h = wv.T.reshape(EMBED_DIM, KV_HEADS, DIM_HEAD)
    bk_h = bk.reshape(KV_HEADS, DIM_HEAD)
    bv_h = bv.reshape(KV_HEADS, DIM_HEAD)

    # Fused QKV weight with every (tensor, head) segment starting on a 128-lane boundary.
    w_qkv = jnp.zeros((EMBED_DIM, QKV_PAD), jnp.float32)
    b_qkv = jnp.zeros((1, QKV_PAD), jnp.float32)
    for t, (w_h, b_h) in enumerate(((wq_g, bq_g), (wk_h, bk_h), (wv_h, bv_h))):
        for h in range(KV_HEADS):
            c0 = (t * KV_HEADS + h) * LANE
            w_qkv = w_qkv.at[:, c0:c0 + DIM_HEAD].set(w_h[:, h, :])
            b_qkv = b_qkv.at[0, c0:c0 + DIM_HEAD].set(b_h[h])

    # fc_out padded to a full 128-lane output (lane-dense store in the kernel).
    w_out = jnp.zeros((KV_EMBED_DIM, OUT_PAD), jnp.float32).at[:, :EMBED_DIM].set(wo.T)
    b_out = jnp.zeros((1, OUT_PAD), jnp.float32).at[0, :EMBED_DIM].set(bo)
    return (w_qkv, b_qkv, w_out, b_out,
            g_attn.reshape(1, EMBED_DIM), b_attn.reshape(1, EMBED_DIM),
            g_ln.reshape(1, KV_EMBED_DIM), b_ln.reshape(1, KV_EMBED_DIM))


def gqa_forward(x, fused_params):
    B, N, E = x.shape
    assert E == EMBED_DIM and N % 8 == 0
    R = B * N
    x2d = x.reshape(R, E)                  # flatten batch*seq into rows

    w_qkv, b_qkv, w_out, b_out, g_attn, b_attn, g_ln, b_ln = fused_params

    def bcast(arr):                        # weights/biases: same block every grid step
        nd = arr.ndim
        return pl.BlockSpec(arr.shape, lambda i, nd=nd: (0,) * nd)

    # NOTE: at large B*N switch to row-blocked tiles sized for v7x's 64 MiB VMEM.
    in_specs = [
        pl.BlockSpec((N, E), lambda i: (i, 0)),       # one batch element per step
        bcast(w_qkv), bcast(b_qkv), bcast(w_out), bcast(b_out),
        bcast(g_attn), bcast(b_attn), bcast(g_ln), bcast(b_ln),
    ]
    out_spec = pl.BlockSpec((N, OUT_PAD), lambda i: (i, 0))   # full-vreg (8,128) blocks

    flops = (2 * R * E * QKV_PAD                           # fused qkv projection
             + 2 * B * KV_HEADS * (2 * N * N * DIM_HEAD)   # q@k^T and p@v
             + 2 * R * KV_EMBED_DIM * OUT_PAD)             # fc_out
    transcendentals = B * KV_HEADS * N * N + 2 * R         # exp + LayerNorm rsqrt
    bytes_accessed = 4 * (x2d.size + R * OUT_PAD + sum(p.size for p in fused_params))
    cost = pl.CostEstimate(flops=flops, transcendentals=transcendentals,
                           bytes_accessed=bytes_accessed)

    out_pad = pl.pallas_call(
        gqa_kernel,
        out_shape=jax.ShapeDtypeStruct((R, OUT_PAD), x.dtype),
        grid=(B,),                                   # batch on the grid (v7x dual-TC)
        in_specs=in_specs,
        out_specs=out_spec,
        compiler_params=pltpu.CompilerParams(
            dimension_semantics=("parallel",),
            vmem_limit_bytes=16 * 1024 * 1024),      # <= scoped default on all gens
        cost_estimate=cost,
    )(x2d, *fused_params)
    # Drop the zero-padded lanes wrapper-side (cheap XLA slice outside the kernel).
    return out_pad[:, :EMBED_DIM].reshape(B, N, EMBED_DIM)


def init_params(key):
    ks = jax.random.split(key, 10)

    def xavier(k, fan_out, fan_in, gain=1.0):
        std = gain * (2.0 / (fan_in + fan_out)) ** 0.5
        return std * jax.random.normal(k, (fan_out, fan_in), jnp.float32)

    wq = xavier(ks[0], EMBED_DIM, EMBED_DIM)             # torch Linear layout (out, in)
    wk = xavier(ks[1], KV_EMBED_DIM, EMBED_DIM)
    wv = xavier(ks[2], KV_EMBED_DIM, EMBED_DIM)          # gamma_init = 1.0
    wo = xavier(ks[3], EMBED_DIM, KV_EMBED_DIM)
    # The torch module zero-inits biases and uses LN gamma=1/beta=0; randomize mildly
    # here so the fused-bias / group-fold / LN paths are genuinely exercised.
    bq = 0.1 * jax.random.normal(ks[4], (EMBED_DIM,), jnp.float32)
    bk = 0.1 * jax.random.normal(ks[5], (KV_EMBED_DIM,), jnp.float32)
    bv = 0.1 * jax.random.normal(ks[6], (KV_EMBED_DIM,), jnp.float32)
    bo = 0.1 * jax.random.normal(ks[7], (EMBED_DIM,), jnp.float32)
    g_attn = 1.0 + 0.1 * jax.random.normal(ks[8], (EMBED_DIM,), jnp.float32)
    b_attn = jnp.zeros((EMBED_DIM,), jnp.float32)
    g_ln = 1.0 + 0.1 * jax.random.normal(ks[9], (KV_EMBED_DIM,), jnp.float32)
    b_ln = jnp.zeros((KV_EMBED_DIM,), jnp.float32)
    return (wq, bq, wk, bk, wv, bv, wo, bo, g_attn, b_attn, g_ln, b_ln)


def reference(x, raw):
    """Plain-JAX mirror of the PyTorch forward (eval mode), unfused params."""
    wq, bq, wk, bk, wv, bv, wo, bo, g1, b1, g2, b2 = raw
    hi = jax.lax.Precision.HIGHEST      # accurate-f32 reference matmuls
    xn = _layer_norm(x, g1, b1, LN_EPS)
    q = jnp.dot(xn, wq.T, precision=hi) + bq
    k = jnp.dot(xn, wk.T, precision=hi) + bk
    v = jnp.dot(xn, wv.T, precision=hi) + bv
    B, N, _ = x.shape
    q = q.reshape(B, N, QUERY_HEADS, DIM_HEAD).transpose(0, 2, 1, 3)   # b h n d
    k = k.reshape(B, N, KV_HEADS, DIM_HEAD).transpose(0, 2, 1, 3)
    v = v.reshape(B, N, KV_HEADS, DIM_HEAD).transpose(0, 2, 1, 3)
    # 'b (h_kv g) n d -> b g h_kv n d'
    qg = q.reshape(B, KV_HEADS, GROUPS, N, DIM_HEAD).transpose(0, 2, 1, 3, 4)
    sim = jnp.einsum('bghnd,bhsd->bhns', qg, k, precision=hi) * (DIM_HEAD ** -0.5)
    m = jnp.max(sim, axis=-1, keepdims=True)
    e = jnp.exp(sim - m)
    p = e / (1.0 + jnp.sum(e, axis=-1, keepdims=True))     # literal SoftmaxOne
    att = jnp.einsum('bhns,bhsd->bhnd', p, v, precision=hi)
    att = att.transpose(0, 2, 1, 3).reshape(B, N, KV_EMBED_DIM)
    att = _layer_norm(att, g2, b2, LN_EPS)
    return jnp.dot(att, wo.T, precision=hi) + bo


if __name__ == "__main__":
    key = jax.random.PRNGKey(0)
    kx, kp = jax.random.split(key)
    B, N = 2, 8
    x = jax.random.normal(kx, (B, N, EMBED_DIM), jnp.float32)
    raw = init_params(kp)
    fused = fuse_params(raw)

    out = gqa_forward(x, fused)
    out = jax.block_until_ready(out)

    ref = reference(x, raw)
    assert out.shape == (B, N, EMBED_DIM)
    err = jnp.max(jnp.abs(out - ref))
    # Exact softmax_one divide restored (approx reciprocal removed), so the only
    # remaining discrepancy is f32 matmul rounding (MXU accumulation order vs. the
    # HIGHEST-precision XLA reference).  1e-3 >> that, and 5x tighter than the error
    # the approx reciprocal produced.
    assert jnp.allclose(out, ref, atol=1e-3, rtol=1e-3), f"max err {err}"
    print("KERNEL_OK")
</pallas_src>

<mosaic_0001>
module attributes {stable_mosaic.version = 11 : i64} {
  func.func @gqa_kernel(%arg0: i32, %arg1: memref<8x64xf32, #tpu.memory_space<vmem>>, %arg2: memref<64x768xf32, #tpu.memory_space<vmem>>, %arg3: memref<1x768xf32, #tpu.memory_space<vmem>>, %arg4: memref<32x128xf32, #tpu.memory_space<vmem>>, %arg5: memref<1x128xf32, #tpu.memory_space<vmem>>, %arg6: memref<1x64xf32, #tpu.memory_space<vmem>>, %arg7: memref<1x64xf32, #tpu.memory_space<vmem>>, %arg8: memref<1x32xf32, #tpu.memory_space<vmem>>, %arg9: memref<1x32xf32, #tpu.memory_space<vmem>>, %arg10: memref<8x128xf32, #tpu.memory_space<vmem>>) attributes {dimension_semantics = [#tpu.dimension_semantics<parallel>], iteration_bounds = array<i64: 2>, scalar_prefetch = 0 : i64, scratch_operands = 0 : i64, tpu.core_type = #tpu.core_type<tc>, window_params = [{transform_indices = @transform_0, window_bounds = array<i64: 8, 64>}, {pipeline_mode = #tpu.pipeline_mode<synchronous>, transform_indices = @transform_1, window_bounds = array<i64: 64, 768>}, {pipeline_mode = #tpu.pipeline_mode<synchronous>, transform_indices = @transform_2, window_bounds = array<i64: 1, 768>}, {pipeline_mode = #tpu.pipeline_mode<synchronous>, transform_indices = @transform_3, window_bounds = array<i64: 32, 128>}, {pipeline_mode = #tpu.pipeline_mode<synchronous>, transform_indices = @transform_4, window_bounds = array<i64: 1, 128>}, {pipeline_mode = #tpu.pipeline_mode<synchronous>, transform_indices = @transform_5, window_bounds = array<i64: 1, 64>}, {pipeline_mode = #tpu.pipeline_mode<synchronous>, transform_indices = @transform_6, window_bounds = array<i64: 1, 64>}, {pipeline_mode = #tpu.pipeline_mode<synchronous>, transform_indices = @transform_7, window_bounds = array<i64: 1, 32>}, {pipeline_mode = #tpu.pipeline_mode<synchronous>, transform_indices = @transform_8, window_bounds = array<i64: 1, 32>}, {transform_indices = @transform_9, window_bounds = array<i64: 8, 128>}]} {
    %c0 = arith.constant 0 : index
    %c0_0 = arith.constant 0 : index
    %0 = vector.load %arg1[%c0, %c0_0] : memref<8x64xf32, #tpu.memory_space<vmem>>, vector<8x64xf32>
    %c0_1 = arith.constant 0 : index
    %c0_2 = arith.constant 0 : index
    %1 = vector.load %arg6[%c0_1, %c0_2] : memref<1x64xf32, #tpu.memory_space<vmem>>, vector<1x64xf32>
    %c0_3 = arith.constant 0 : index
    %c0_4 = arith.constant 0 : index
    %2 = vector.load %arg7[%c0_3, %c0_4] : memref<1x64xf32, #tpu.memory_space<vmem>>, vector<1x64xf32>
    %cst = arith.constant dense<0.000000e+00> : vector<8xf32>
    %3 = vector.multi_reduction <add>, %0, %cst [1] : vector<8x64xf32> to vector<8xf32>
    %4 = vector.shape_cast %3 : vector<8xf32> to vector<8x1xf32>
    %cst_5 = arith.constant 6.400000e+01 : f32
    %5 = vector.broadcast %cst_5 : f32 to vector<8x1xf32>
    %6 = arith.divf %4, %5 : vector<8x1xf32>
    %7 = vector.broadcast %6 : vector<8x1xf32> to vector<8x64xf32>
    %8 = arith.subf %0, %7 : vector<8x64xf32>
    %9 = arith.mulf %8, %8 : vector<8x64xf32>
    %cst_6 = arith.constant dense<0.000000e+00> : vector<8xf32>
    %10 = vector.multi_reduction <add>, %9, %cst_6 [1] : vector<8x64xf32> to vector<8xf32>
    %11 = vector.shape_cast %10 : vector<8xf32> to vector<8x1xf32>
    %cst_7 = arith.constant 6.400000e+01 : f32
    %12 = vector.broadcast %cst_7 : f32 to vector<8x1xf32>
    %13 = arith.divf %11, %12 : vector<8x1xf32>
    %14 = vector.broadcast %6 : vector<8x1xf32> to vector<8x64xf32>
    %15 = arith.subf %0, %14 : vector<8x64xf32>
    %cst_8 = arith.constant 9.99999974E-6 : f32
    %16 = vector.broadcast %cst_8 : f32 to vector<8x1xf32>
    %17 = arith.addf %13, %16 : vector<8x1xf32>
    %18 = math.rsqrt %17 : vector<8x1xf32>
    %19 = vector.broadcast %18 : vector<8x1xf32> to vector<8x64xf32>
    %20 = arith.mulf %15, %19 : vector<8x64xf32>
    %21 = vector.broadcast %1 : vector<1x64xf32> to vector<8x64xf32>
    %22 = arith.mulf %20, %21 : vector<8x64xf32>
    %23 = vector.broadcast %2 : vector<1x64xf32> to vector<8x64xf32>
    %24 = arith.addf %22, %23 : vector<8x64xf32>
    %c0_9 = arith.constant 0 : index
    %c0_10 = arith.constant 0 : index
    %25 = vector.load %arg2[%c0_9, %c0_10] : memref<64x768xf32, #tpu.memory_space<vmem>>, vector<64x768xf32>
    %cst_11 = arith.constant dense<0.000000e+00> : vector<8x768xf32>
    %26 = tpu.matmul %24, %25, %cst_11 {dimension_numbers = #tpu.dot_dimension_numbers<[1], [0], [0], [1], [0, 0, 1, 1], [], []>} : vector<8x64xf32>, vector<64x768xf32>, vector<8x768xf32> -> vector<8x768xf32>
    %c0_12 = arith.constant 0 : index
    %c0_13 = arith.constant 0 : index
    %27 = vector.load %arg3[%c0_12, %c0_13] : memref<1x768xf32, #tpu.memory_space<vmem>>, vector<1x768xf32>
    %28 = vector.broadcast %27 : vector<1x768xf32> to vector<8x768xf32>
    %29 = arith.addf %26, %28 : vector<8x768xf32>
    %30 = vector.extract_strided_slice %29 {offsets = [0, 0], sizes = [8, 16], strides = [1, 1]} : vector<8x768xf32> to vector<8x16xf32>
    %31 = vector.extract_strided_slice %29 {offsets = [0, 128], sizes = [8, 16], strides = [1, 1]} : vector<8x768xf32> to vector<8x16xf32>
    %32 = vector.shape_cast %30 : vector<8x16xf32> to vector<1x8x16xf32>
    %33 = vector.shape_cast %31 : vector<8x16xf32> to vector<1x8x16xf32>
    %34 = tpu.concatenate %32, %33 in 0 : vector<1x8x16xf32>, vector<1x8x16xf32> -> vector<2x8x16xf32>
    %35 = vector.extract_strided_slice %29 {offsets = [0, 256], sizes = [8, 16], strides = [1, 1]} : vector<8x768xf32> to vector<8x16xf32>
    %36 = vector.extract_strided_slice %29 {offsets = [0, 384], sizes = [8, 16], strides = [1, 1]} : vector<8x768xf32> to vector<8x16xf32>
    %37 = vector.shape_cast %35 : vector<8x16xf32> to vector<1x8x16xf32>
    %38 = vector.shape_cast %36 : vector<8x16xf32> to vector<1x8x16xf32>
    %39 = tpu.concatenate %37, %38 in 0 : vector<1x8x16xf32>, vector<1x8x16xf32> -> vector<2x8x16xf32>
    %40 = vector.extract_strided_slice %29 {offsets = [0, 512], sizes = [8, 16], strides = [1, 1]} : vector<8x768xf32> to vector<8x16xf32>
    %41 = vector.extract_strided_slice %29 {offsets = [0, 640], sizes = [8, 16], strides = [1, 1]} : vector<8x768xf32> to vector<8x16xf32>
    %42 = vector.shape_cast %40 : vector<8x16xf32> to vector<1x8x16xf32>
    %43 = vector.shape_cast %41 : vector<8x16xf32> to vector<1x8x16xf32>
    %44 = tpu.concatenate %42, %43 in 0 : vector<1x8x16xf32>, vector<1x8x16xf32> -> vector<2x8x16xf32>
    "tpu.trace_start"() <{level = 10 : i32, message = "hnd,hsd->hns"}> : () -> ()
    %cst_14 = arith.constant dense<0.000000e+00> : vector<2x8x8xf32>
    %45 = tpu.matmul %34, %39, %cst_14 {dimension_numbers = #tpu.dot_dimension_numbers<[2], [2], [1], [1], [0, 0, 0, 1, 1, 1], [0], [0]>} : vector<2x8x16xf32>, vector<2x8x16xf32>, vector<2x8x8xf32> -> vector<2x8x8xf32>
    "tpu.trace_stop"() : () -> ()
    %cst_15 = arith.constant dense<0xFF800000> : vector<2x8xf32>
    %46 = vector.multi_reduction <maximumf>, %45, %cst_15 [2] : vector<2x8x8xf32> to vector<2x8xf32>
    %47 = vector.shape_cast %46 : vector<2x8xf32> to vector<2x8x1xf32>
    %48 = vector.broadcast %47 : vector<2x8x1xf32> to vector<2x8x8xf32>
    %49 = arith.subf %45, %48 : vector<2x8x8xf32>
    %50 = math.exp %49 : vector<2x8x8xf32>
    %cst_16 = arith.constant dense<0.000000e+00> : vector<2x8xf32>
    %51 = vector.multi_reduction <add>, %50, %cst_16 [2] : vector<2x8x8xf32> to vector<2x8xf32>
    %52 = vector.shape_cast %51 : vector<2x8xf32> to vector<2x8x1xf32>
    %cst_17 = arith.constant 1.000000e+00 : f32
    %53 = vector.broadcast %cst_17 : f32 to vector<2x8x1xf32>
    %54 = arith.addf %53, %52 : vector<2x8x1xf32>
    %55 = vector.broadcast %54 : vector<2x8x1xf32> to vector<2x8x8xf32>
    %56 = arith.divf %50, %55 : vector<2x8x8xf32>
    "tpu.trace_start"() <{level = 10 : i32, message = "hns,hsd->hnd"}> : () -> ()
    %cst_18 = arith.constant dense<0.000000e+00> : vector<2x8x16xf32>
    %57 = tpu.matmul %56, %44, %cst_18 {dimension_numbers = #tpu.dot_dimension_numbers<[2], [1], [1], [2], [0, 0, 0, 1, 1, 2], [0], [0]>} : vector<2x8x8xf32>, vector<2x8x16xf32>, vector<2x8x16xf32> -> vector<2x8x16xf32>
    "tpu.trace_stop"() : () -> ()
    %58 = vector.extract_strided_slice %57 {offsets = [0, 0, 0], sizes = [1, 8, 16], strides = [1, 1, 1]} : vector<2x8x16xf32> to vector<1x8x16xf32>
    %59 = vector.shape_cast %58 : vector<1x8x16xf32> to vector<8x16xf32>
    %60 = vector.extract_strided_slice %57 {offsets = [1, 0, 0], sizes = [1, 8, 16], strides = [1, 1, 1]} : vector<2x8x16xf32> to vector<1x8x16xf32>
    %61 = vector.shape_cast %60 : vector<1x8x16xf32> to vector<8x16xf32>
    %62 = tpu.concatenate %59, %61 in 1 : vector<8x16xf32>, vector<8x16xf32> -> vector<8x32xf32>
    %c0_19 = arith.constant 0 : index
    %c0_20 = arith.constant 0 : index
    %63 = vector.load %arg8[%c0_19, %c0_20] : memref<1x32xf32, #tpu.memory_space<vmem>>, vector<1x32xf32>
    %c0_21 = arith.constant 0 : index
    %c0_22 = arith.constant 0 : index
    %64 = vector.load %arg9[%c0_21, %c0_22] : memref<1x32xf32, #tpu.memory_space<vmem>>, vector<1x32xf32>
    %cst_23 = arith.constant dense<0.000000e+00> : vector<8xf32>
    %65 = vector.multi_reduction <add>, %62, %cst_23 [1] : vector<8x32xf32> to vector<8xf32>
    %66 = vector.shape_cast %65 : vector<8xf32> to vector<8x1xf32>
    %cst_24 = arith.constant 3.200000e+01 : f32
    %67 = vector.broadcast %cst_24 : f32 to vector<8x1xf32>
    %68 = arith.divf %66, %67 : vector<8x1xf32>
    %69 = vector.broadcast %68 : vector<8x1xf32> to vector<8x32xf32>
    %70 = arith.subf %62, %69 : vector<8x32xf32>
    %71 = arith.mulf %70, %70 : vector<8x32xf32>
    %cst_25 = arith.constant dense<0.000000e+00> : vector<8xf32>
    %72 = vector.multi_reduction <add>, %71, %cst_25 [1] : vector<8x32xf32> to vector<8xf32>
    %73 = vector.shape_cast %72 : vector<8xf32> to vector<8x1xf32>
    %cst_26 = arith.constant 3.200000e+01 : f32
    %74 = vector.broadcast %cst_26 : f32 to vector<8x1xf32>
    %75 = arith.divf %73, %74 : vector<8x1xf32>
    %76 = vector.broadcast %68 : vector<8x1xf32> to vector<8x32xf32>
    %77 = arith.subf %62, %76 : vector<8x32xf32>
    %cst_27 = arith.constant 9.99999974E-6 : f32
    %78 = vector.broadcast %cst_27 : f32 to vector<8x1xf32>
    %79 = arith.addf %75, %78 : vector<8x1xf32>
    %80 = math.rsqrt %79 : vector<8x1xf32>
    %81 = vector.broadcast %80 : vector<8x1xf32> to vector<8x32xf32>
    %82 = arith.mulf %77, %81 : vector<8x32xf32>
    %83 = vector.broadcast %63 : vector<1x32xf32> to vector<8x32xf32>
    %84 = arith.mulf %82, %83 : vector<8x32xf32>
    %85 = vector.broadcast %64 : vector<1x32xf32> to vector<8x32xf32>
    %86 = arith.addf %84, %85 : vector<8x32xf32>
    %c0_28 = arith.constant 0 : index
    %c0_29 = arith.constant 0 : index
    %87 = vector.load %arg4[%c0_28, %c0_29] : memref<32x128xf32, #tpu.memory_space<vmem>>, vector<32x128xf32>
    %cst_30 = arith.constant dense<0.000000e+00> : vector<8x128xf32>
    %88 = tpu.matmul %86, %87, %cst_30 {dimension_numbers = #tpu.dot_dimension_numbers<[1], [0], [0], [1], [0, 0, 1, 1], [], []>} : vector<8x32xf32>, vector<32x128xf32>, vector<8x128xf32> -> vector<8x128xf32>
    %c0_31 = arith.constant 0 : index
    %c0_32 = arith.constant 0 : index
    %89 = vector.load %arg5[%c0_31, %c0_32] : memref<1x128xf32, #tpu.memory_space<vmem>>, vector<1x128xf32>
    %90 = vector.broadcast %89 : vector<1x128xf32> to vector<8x128xf32>
    %91 = arith.addf %88, %90 : vector<8x128xf32>
    %c0_33 = arith.constant 0 : index
    %c0_34 = arith.constant 0 : index
    %92 = vector.load %arg10[%c0_33, %c0_34] : memref<8x128xf32, #tpu.memory_space<vmem>>, vector<8x128xf32>
    tpu.vector_store %arg10[%c0_33, %c0_34], %91 {strides = array<i32>} : memref<8x128xf32, #tpu.memory_space<vmem>>, vector<8x128xf32>,
    return
  }
  func.func @transform_0(%arg0: i32) -> (i32, i32) {
    %c0_i32 = arith.constant 0 : i32
    %c0_i32_0 = arith.constant 0 : i32
    return %arg0, %c0_i32 : i32, i32
  }
  func.func @transform_1(%arg0: i32) -> (i32, i32) {
    %c0_i32 = arith.constant 0 : i32
    %c0_i32_0 = arith.constant 0 : i32
    %c0_i32_1 = arith.constant 0 : i32
    return %c0_i32, %c0_i32_0 : i32, i32
  }
  func.func @transform_2(%arg0: i32) -> (i32, i32) {
    %c0_i32 = arith.constant 0 : i32
    %c0_i32_0 = arith.constant 0 : i32
    %c0_i32_1 = arith.constant 0 : i32
    return %c0_i32, %c0_i32_0 : i32, i32
  }
  func.func @transform_3(%arg0: i32) -> (i32, i32) {
    %c0_i32 = arith.constant 0 : i32
    %c0_i32_0 = arith.constant 0 : i32
    %c0_i32_1 = arith.constant 0 : i32
    return %c0_i32, %c0_i32_0 : i32, i32
  }
  func.func @transform_4(%arg0: i32) -> (i32, i32) {
    %c0_i32 = arith.constant 0 : i32
    %c0_i32_0 = arith.constant 0 : i32
    %c0_i32_1 = arith.constant 0 : i32
    return %c0_i32, %c0_i32_0 : i32, i32
  }
  func.func @transform_5(%arg0: i32) -> (i32, i32) {
    %c0_i32 = arith.constant 0 : i32
    %c0_i32_0 = arith.constant 0 : i32
    %c0_i32_1 = arith.constant 0 : i32
    return %c0_i32, %c0_i32_0 : i32, i32
  }
  func.func @transform_6(%arg0: i32) -> (i32, i32) {
    %c0_i32 = arith.constant 0 : i32
    %c0_i32_0 = arith.constant 0 : i32
    %c0_i32_1 = arith.constant 0 : i32
    return %c0_i32, %c0_i32_0 : i32, i32
  }
  func.func @transform_7(%arg0: i32) -> (i32, i32) {
    %c0_i32 = arith.constant 0 : i32
    %c0_i32_0 = arith.constant 0 : i32
    %c0_i32_1 = arith.constant 0 : i32
    return %c0_i32, %c0_i32_0 : i32, i32
  }
  func.func @transform_8(%arg0: i32) -> (i32, i32) {
    %c0_i32 = arith.constant 0 : i32
    %c0_i32_0 = arith.constant 0 : i32
    %c0_i32_1 = arith.constant 0 : i32
    return %c0_i32, %c0_i32_0 : i32, i32
  }
  func.func @transform_9(%arg0: i32) -> (i32, i32) {
    %c0_i32 = arith.constant 0 : i32
    %c0_i32_0 = arith.constant 0 : i32
    return %arg0, %c0_i32 : i32, i32
  }
}

</mosaic_0001>

<llo_original>
// kernel: tpu_custom_call.1
$region0: #{tpu_custom_call.1}
  #allocation0 [shape = 'u32[]', space=smem, size = 0x4, offset = 0x4, fixed_abs, tag = 'smem constant byte address 0x4 - core index']
  #allocation1 [shape = 'u32[144,128]{1,0:T(1,128)}', space=vmem, size = 0x12000, scoped, tag = 'internal scratch']
  %s0 = inlined_call_operand.hbm [shape: f32[16,64], index: 0, kind: input, shape index: {}]
  %s1 = inlined_call_operand.hbm [shape: f32[64,768], index: 1, kind: input, shape index: {}]
  %s2 = inlined_call_operand.vmem [shape: f32[1,768], index: 2, kind: input, shape index: {}]
  %s3 = inlined_call_operand.hbm [shape: f32[32,128], index: 3, kind: input, shape index: {}]
  %s4 = inlined_call_operand.vmem [shape: f32[1,128], index: 4, kind: input, shape index: {}]
  %s5 = inlined_call_operand.vmem [shape: f32[1,64], index: 5, kind: input, shape index: {}]
  %s6 = inlined_call_operand.vmem [shape: f32[1,64], index: 6, kind: input, shape index: {}]
  %s7 = inlined_call_operand.vmem [shape: f32[1,32], index: 7, kind: input, shape index: {}]
  %s8 = inlined_call_operand.vmem [shape: f32[1,32], index: 8, kind: input, shape index: {}]
  %s9 = inlined_call_operand.hbm [shape: f32[16,128], index: 9, kind: output, shape index: {}]
  %s10 = sld [smem:[#allocation0]]
  $region81: #{tpu_custom_call.1} parent=0
    _
  %s12 = ssub.s32 1, %s10
  %s13 = scalar_select 0, %s12, %s10
  $region1: #{tpu_custom_call.1} parent=0
    #allocation2 [shape = 'u8[8192]{0}', space=vmem, size = 0x2000, scoped, tag = 'input window, operand 0']
    #allocation3 [shape = 's32[2]{0}', space=sflag, size = 0x8, scoped, tag = 'scoped memory for tpu_custom_call.1']
    #allocation4 [shape = 's32[2]{0}', space=sflag, size = 0x8, scoped, tag = 'scoped memory for tpu_custom_call.1']
    #allocation5 [shape = 'u8[196608]{0}', space=vmem, size = 0x30000, scoped, tag = 'input window, operand 1, single buffered']
    #allocation6 [shape = 's32[1]{0}', space=sflag, size = 0x4, scoped, tag = 'scoped memory for tpu_custom_call.1']
    #allocation7 [shape = 'u8[16384]{0}', space=vmem, size = 0x4000, scoped, tag = 'input window, operand 3, single buffered']
    #allocation8 [shape = 'u8[8192]{0}', space=vmem, size = 0x2000, scoped, tag = 'output window, operand 0']
    %14 = vsyncpa [#allocation3], 0
    %s15 = scalar_lea.sflag [#allocation3], 1
    %16 = vsyncpa %s15, 0
    %17 = vsyncpa [#allocation6], 0
    %18 = vsyncpa [#allocation4], 0
    %s19 = scalar_lea.sflag [#allocation4], 1
    %20 = vsyncpa %s19, 0
    loop: start=0, step=1, limit=4
    $region2: #{tpu_custom_call.1} parent=1 // loop_pre_header
      _
    $region3: #{tpu_custom_call.1} parent=1 // loop_header
      %s22 = sphi 0, %s26
      %p23 = scmp.ge.s32.totalorder %s22, 4
      %s32 = sphi 0, %s34
      %s35 = sphi 0, %s32
      %s36 = sphi 0, %s35
      %s52 = sphi 0, %s36
      %s56 = sphi 0, %s56
      %s58 = sphi 0, %s56
      %s59 = sphi 0, %s58
      %s73 = sphi 0, %s59
      %s77 = sphi 0, %s77
      %s79 = sphi 0, %s77
      %s80 = sphi 0, %s79
      %s94 = sphi 0, %s80
      %s98 = sphi 0, %s98
      %s100 = sphi 0, %s98
      %s101 = sphi 0, %s100
      %s115 = sphi 0, %s101
      %s119 = sphi 0, %s119
      %s121 = sphi 0, %s119
      %s122 = sphi 0, %s121
      %s136 = sphi 0, %s122
      %s140 = sphi 0, %s140
      %s142 = sphi 0, %s140
      %s143 = sphi 0, %s142
      %s157 = sphi 0, %s143
      %s161 = sphi 0, %s161
      %s163 = sphi 0, %s161
      %s164 = sphi 0, %s163
      %s178 = sphi 0, %s164
      %s182 = sphi 0, %s182
      %s184 = sphi 0, %s182
      %s185 = sphi 0, %s184
      %s199 = sphi 0, %s185
      %s203 = sphi 0, %s203
      %s205 = sphi 0, %s203
      %s206 = sphi 0, %s205
      %s220 = sphi 0, %s206
      %s226 = sphi 0, %s228
      %s229 = sphi 0, %s226
      %s230 = sphi 0, %s229
      %s246 = sphi 0, %s230
    $region4: #{tpu_custom_call.1} parent=1 // loop_header_branch
      %25 = sbr.rel (%p23) target = $region8
    $region5: #{tpu_custom_call.1} parent=1 // loop_body
      %s27 = ssub.s32 %s22, 1
      %s28 = ssub.s32 %s22, 2
      %s29 = sadd.s32 %s22, 1
      %s30 = ssub.s32 %s22, %s29
      %p31 = scmp.eq.s32.totalorder %s30, 0
      %s33 = sadd.s32 %s32, 1
      %s34 = scalar_select %p31, %s32, %s33
      %p37 = pneg %p31
      %p38 = scmp.eq.s32.totalorder %s22, 1
      %p39 = por %p37, %p38
      %p40 = scmp.ne.s32.totalorder %s32, %s35
      %p41 = scmp.eq.s32.totalorder %s22, 0
      %p42 = por %p40, %p41
      %p43 = scmp.ne.s32.totalorder %s32, %s35
      %p44 = scmp.eq.s32.totalorder %s27, 1
      %p45 = por %p43, %p44
      %p46 = scmp.ne.s32.totalorder %s35, %s36
      %p47 = scmp.eq.s32.totalorder %s27, 0
      %p48 = por %p46, %p47
      %p49 = scmp.ne.s32.totalorder %s35, %s36
      %p50 = scmp.eq.s32.totalorder %s28, 1
      %p51 = por %p49, %p50
      %p53 = scmp.ne.s32.totalorder %s36, %s52
      %p54 = scmp.eq.s32.totalorder %s28, 0
      %p55 = por %p53, %p54
      %s57 = sadd.s32 %s56, 1
      %p60 = scmp.eq.s32.totalorder %s22, 1
      %p61 = scmp.ne.s32.totalorder %s56, %s58
      %p62 = scmp.eq.s32.totalorder %s22, 0
      %p63 = por %p61, %p62
      %p64 = scmp.ne.s32.totalorder %s56, %s58
      %p65 = scmp.eq.s32.totalorder %s27, 1
      %p66 = por %p64, %p65
      %p67 = scmp.ne.s32.totalorder %s58, %s59
      %p68 = scmp.eq.s32.totalorder %s27, 0
      %p69 = por %p67, %p68
      %p70 = scmp.ne.s32.totalorder %s58, %s59
      %p71 = scmp.eq.s32.totalorder %s28, 1
      %p72 = por %p70, %p71
      %p74 = scmp.ne.s32.totalorder %s59, %s73
      %p75 = scmp.eq.s32.totalorder %s28, 0
      %p76 = por %p74, %p75
      %s78 = sadd.s32 %s77, 1
      %p81 = scmp.eq.s32.totalorder %s22, 1
      %p82 = scmp.ne.s32.totalorder %s77, %s79
      %p83 = scmp.eq.s32.totalorder %s22, 0
      %p84 = por %p82, %p83
      %p85 = scmp.ne.s32.totalorder %s77, %s79
      %p86 = scmp.eq.s32.totalorder %s27, 1
      %p87 = por %p85, %p86
      %p88 = scmp.ne.s32.totalorder %s79, %s80
      %p89 = scmp.eq.s32.totalorder %s27, 0
      %p90 = por %p88, %p89
      %p91 = scmp.ne.s32.totalorder %s79, %s80
      %p92 = scmp.eq.s32.totalorder %s28, 1
      %p93 = por %p91, %p92
      %p95 = scmp.ne.s32.totalorder %s80, %s94
      %p96 = scmp.eq.s32.totalorder %s28, 0
      %p97 = por %p95, %p96
      %s99 = sadd.s32 %s98, 1
      %p102 = scmp.eq.s32.totalorder %s22, 1
      %p103 = scmp.ne.s32.totalorder %s98, %s100
      %p104 = scmp.eq.s32.totalorder %s22, 0
      %p105 = por %p103, %p104
      %p106 = scmp.ne.s32.totalorder %s98, %s100
      %p107 = scmp.eq.s32.totalorder %s27, 1
      %p108 = por %p106, %p107
      %p109 = scmp.ne.s32.totalorder %s100, %s101
      %p110 = scmp.eq.s32.totalorder %s27, 0
      %p111 = por %p109, %p110
      %p112 = scmp.ne.s32.totalorder %s100, %s101
      %p113 = scmp.eq.s32.totalorder %s28, 1
      %p114 = por %p112, %p113
      %p116 = scmp.ne.s32.totalorder %s101, %s115
      %p117 = scmp.eq.s32.totalorder %s28, 0
      %p118 = por %p116, %p117
      %s120 = sadd.s32 %s119, 1
      %p123 = scmp.eq.s32.totalorder %s22, 1
      %p124 = scmp.ne.s32.totalorder %s119, %s121
      %p125 = scmp.eq.s32.totalorder %s22, 0
      %p126 = por %p124, %p125
      %p127 = scmp.ne.s32.totalorder %s119, %s121
      %p128 = scmp.eq.s32.totalorder %s27, 1
      %p129 = por %p127, %p128
      %p130 = scmp.ne.s32.totalorder %s121, %s122
      %p131 = scmp.eq.s32.totalorder %s27, 0
      %p132 = por %p130, %p131
      %p133 = scmp.ne.s32.totalorder %s121, %s122
      %p134 = scmp.eq.s32.totalorder %s28, 1
      %p135 = por %p133, %p134
      %p137 = scmp.ne.s32.totalorder %s122, %s136
      %p138 = scmp.eq.s32.totalorder %s28, 0
      %p139 = por %p137, %p138
      %s141 = sadd.s32 %s140, 1
      %p144 = scmp.eq.s32.totalorder %s22, 1
      %p145 = scmp.ne.s32.totalorder %s140, %s142
      %p146 = scmp.eq.s32.totalorder %s22, 0
      %p147 = por %p145, %p146
      %p148 = scmp.ne.s32.totalorder %s140, %s142
      %p149 = scmp.eq.s32.totalorder %s27, 1
      %p150 = por %p148, %p149
      %p151 = scmp.ne.s32.totalorder %s142, %s143
      %p152 = scmp.eq.s32.totalorder %s27, 0
      %p153 = por %p151, %p152
      %p154 = scmp.ne.s32.totalorder %s142, %s143
      %p155 = scmp.eq.s32.totalorder %s28, 1
      %p156 = por %p154, %p155
      %p158 = scmp.ne.s32.totalorder %s143, %s157
      %p159 = scmp.eq.s32.totalorder %s28, 0
      %p160 = por %p158, %p159
      %s162 = sadd.s32 %s161, 1
      %p165 = scmp.eq.s32.totalorder %s22, 1
      %p166 = scmp.ne.s32.totalorder %s161, %s163
      %p167 = scmp.eq.s32.totalorder %s22, 0
      %p168 = por %p166, %p167
      %p169 = scmp.ne.s32.totalorder %s161, %s163
      %p170 = scmp.eq.s32.totalorder %s27, 1
      %p171 = por %p169, %p170
      %p172 = scmp.ne.s32.totalorder %s163, %s164
      %p173 = scmp.eq.s32.totalorder %s27, 0
      %p174 = por %p172, %p173
      %p175 = scmp.ne.s32.totalorder %s163, %s164
      %p176 = scmp.eq.s32.totalorder %s28, 1
      %p177 = por %p175, %p176
      %p179 = scmp.ne.s32.totalorder %s164, %s178
      %p180 = scmp.eq.s32.totalorder %s28, 0
      %p181 = por %p179, %p180
      %s183 = sadd.s32 %s182, 1
      %p186 = scmp.eq.s32.totalorder %s22, 1
      %p187 = scmp.ne.s32.totalorder %s182, %s184
      %p188 = scmp.eq.s32.totalorder %s22, 0
      %p189 = por %p187, %p188
      %p190 = scmp.ne.s32.totalorder %s182, %s184
      %p191 = scmp.eq.s32.totalorder %s27, 1
      %p192 = por %p190, %p191
      %p193 = scmp.ne.s32.totalorder %s184, %s185
      %p194 = scmp.eq.s32.totalorder %s27, 0
      %p195 = por %p193, %p194
      %p196 = scmp.ne.s32.totalorder %s184, %s185
      %p197 = scmp.eq.s32.totalorder %s28, 1
      %p198 = por %p196, %p197
      %p200 = scmp.ne.s32.totalorder %s185, %s199
      %p201 = scmp.eq.s32.totalorder %s28, 0
      %p202 = por %p200, %p201
      %s204 = sadd.s32 %s203, 1
      %p207 = scmp.eq.s32.totalorder %s22, 1
      %p208 = scmp.ne.s32.totalorder %s203, %s205
      %p209 = scmp.eq.s32.totalorder %s22, 0
      %p210 = por %p208, %p209
      %p211 = scmp.ne.s32.totalorder %s203, %s205
      %p212 = scmp.eq.s32.totalorder %s27, 1
      %p213 = por %p211, %p212
      %p214 = scmp.ne.s32.totalorder %s205, %s206
      %p215 = scmp.eq.s32.totalorder %s27, 0
      %p216 = por %p214, %p215
      %p217 = scmp.ne.s32.totalorder %s205, %s206
      %p218 = scmp.eq.s32.totalorder %s28, 1
      %p219 = por %p217, %p218
      %p221 = scmp.ne.s32.totalorder %s206, %s220
      %p222 = scmp.eq.s32.totalorder %s28, 0
      %p223 = por %p221, %p222
      %s224 = ssub.s32 %s22, %s29
      %p225 = scmp.eq.s32.totalorder %s224, 0
      %s227 = sadd.s32 %s226, 1
      %s228 = scalar_select %p225, %s226, %s227
      %p231 = pneg %p225
      %p232 = scmp.eq.s32.totalorder %s22, 1
      %p233 = por %p231, %p232
      %p234 = scmp.ne.s32.totalorder %s226, %s229
      %p235 = scmp.eq.s32.totalorder %s22, 0
      %p236 = por %p234, %p235
      %p237 = scmp.ne.s32.totalorder %s226, %s229
      %p238 = scmp.eq.s32.totalorder %s27, 1
      %p239 = por %p237, %p238
      %p240 = scmp.ne.s32.totalorder %s229, %s230
      %p241 = scmp.eq.s32.totalorder %s27, 0
      %p242 = por %p240, %p241
      %p243 = scmp.ne.s32.totalorder %s229, %s230
      %p244 = scmp.eq.s32.totalorder %s28, 1
      %p245 = por %p243, %p244
      %p247 = scmp.ne.s32.totalorder %s230, %s246
      %p248 = scmp.eq.s32.totalorder %s28, 0
      %p249 = por %p247, %p248
      %p250 = scmp.le.s32.totalorder 1, %s22
      %p251 = scmp.lt.s32.totalorder %s22, 3
      %p252 = pnand %p250, %p251
      %p253 = pneg %p252
      // Predicated region
      $region9: #{tpu_custom_call.1} parent=5 // pred_check
        _
      $region10: #{tpu_custom_call.1} parent=5 // pred_check_branch
        %255 = sbr.rel (%p252) target = $region12
      $region11: #{tpu_custom_call.1} parent=5 // pred_region
        %s256 = ssub.s32 %s22, 1
        // Predicated region
        $region13: #{tpu_custom_call.1} parent=11 // pred_check
          %p257 = pneg %p69
        $region14: #{tpu_custom_call.1} parent=11 // pred_check_branch
          %259 = sbr.rel (%p257) target = $region16
        $region15: #{tpu_custom_call.1} parent=11 // pred_region
          %s261 = ssub.s32 6144, 6144
          %262 = vsyncadd [#allocation6], %s261
          %s263 = sshll.u32 [#allocation5], 4
          %s264 = int_to_ptr.vmem [resolvable:$true] %s263
          %269 = dma.hbm_to_vmem [thread:$0]  %s1, 6144, %s264, [#allocation6], 768, 768, 48
        $region16: #{tpu_custom_call.1} parent=11 // pred_fallthru
          _
        // Predicated region
        $region17: #{tpu_custom_call.1} parent=11 // pred_check
          %p270 = pneg %p90
        $region18: #{tpu_custom_call.1} parent=11 // pred_check_branch
          %272 = sbr.rel (%p270) target = $region20
        $region19: #{tpu_custom_call.1} parent=11 // pred_region
          _
        $region20: #{tpu_custom_call.1} parent=11 // pred_fallthru
          _
        // Predicated region
        $region21: #{tpu_custom_call.1} parent=11 // pred_check
          %p273 = pneg %p111
        $region22: #{tpu_custom_call.1} parent=11 // pred_check_branch
          %275 = sbr.rel (%p273) target = $region24
        $region23: #{tpu_custom_call.1} parent=11 // pred_region
          %s277 = ssub.s32 512, 512
          %278 = vsyncadd [#allocation6], %s277
          %s279 = sshll.u32 [#allocation7], 4
          %s280 = int_to_ptr.vmem [resolvable:$true] %s279
          %285 = dma.hbm_to_vmem [thread:$0]  %s3, 512, %s280, [#allocation6], 128, 128, 8
        $region24: #{tpu_custom_call.1} parent=11 // pred_fallthru
          _
        // Predicated region
        $region25: #{tpu_custom_call.1} parent=11 // pred_check
          %p286 = pneg %p132
        $region26: #{tpu_custom_call.1} parent=11 // pred_check_branch
          %288 = sbr.rel (%p286) target = $region28
        $region27: #{tpu_custom_call.1} parent=11 // pred_region
          _
        $region28: #{tpu_custom_call.1} parent=11 // pred_fallthru
          _
        // Predicated region
        $region29: #{tpu_custom_call.1} parent=11 // pred_check
          %p289 = pneg %p153
        $region30: #{tpu_custom_call.1} parent=11 // pred_check_branch
          %291 = sbr.rel (%p289) target = $region32
        $region31: #{tpu_custom_call.1} parent=11 // pred_region
          _
        $region32: #{tpu_custom_call.1} parent=11 // pred_fallthru
          _
        // Predicated region
        $region33: #{tpu_custom_call.1} parent=11 // pred_check
          %p292 = pneg %p174
        $region34: #{tpu_custom_call.1} parent=11 // pred_check_branch
          %294 = sbr.rel (%p292) target = $region36
        $region35: #{tpu_custom_call.1} parent=11 // pred_region
          _
        $region36: #{tpu_custom_call.1} parent=11 // pred_fallthru
          _
        // Predicated region
        $region37: #{tpu_custom_call.1} parent=11 // pred_check
          %p295 = pneg %p195
        $region38: #{tpu_custom_call.1} parent=11 // pred_check_branch
          %297 = sbr.rel (%p295) target = $region40
        $region39: #{tpu_custom_call.1} parent=11 // pred_region
          _
        $region40: #{tpu_custom_call.1} parent=11 // pred_fallthru
          _
        // Predicated region
        $region41: #{tpu_custom_call.1} parent=11 // pred_check
          %p298 = pneg %p216
        $region42: #{tpu_custom_call.1} parent=11 // pred_check_branch
          %300 = sbr.rel (%p298) target = $region44
        $region43: #{tpu_custom_call.1} parent=11 // pred_region
          _
        $region44: #{tpu_custom_call.1} parent=11 // pred_fallthru
          _
      $region12: #{tpu_custom_call.1} parent=5 // pred_fallthru
        _
      %p301 = scmp.lt.s32.totalorder %s22, 2
      // Predicated region
      $region45: #{tpu_custom_call.1} parent=5 // pred_check
        %p302 = pneg %p301
      $region46: #{tpu_custom_call.1} parent=5 // pred_check_branch
        %304 = sbr.rel (%p302) target = $region48
      $region47: #{tpu_custom_call.1} parent=5 // pred_region
        // Predicated region
        $region49: #{tpu_custom_call.1} parent=47 // pred_check
          %p305 = pneg %p42
        $region50: #{tpu_custom_call.1} parent=47 // pred_check_branch
          %307 = sbr.rel (%p305) target = $region52
        $region51: #{tpu_custom_call.1} parent=47 // pred_region
          %s308 = sand.u32 %s32, 1
          %s309 = scalar_lea.sflag [#allocation3], %s308
          %s310 = sand.u32 %s32, 1
          %s311 = smul.addr %s310, 8
          %s312 = scalar_lea.vmem [#allocation2], %s311
          %s314 = ssub.s32 128, 128
          %315 = vsyncadd %s309, %s314
          %s316 = smul.addr %s22, 128
          %s317 = scalar_lea.hbm %s0, %s316
          %s319 = sshll.u32 %s312, 4
          %s320 = int_to_ptr.vmem [resolvable:$true] %s319
          %322 = dma.hbm_to_vmem [thread:$0]  %s317, 128, %s320, %s309
        $region52: #{tpu_custom_call.1} parent=47 // pred_fallthru
          _
      $region48: #{tpu_custom_call.1} parent=5 // pred_fallthru
        _
      %p323 = scmp.le.s32.totalorder 1, %s22
      %p324 = scmp.lt.s32.totalorder %s22, 3
      %p325 = pnand %p323, %p324
      %p326 = pneg %p325
      // Predicated region
      $region53: #{tpu_custom_call.1} parent=5 // pred_check
        _
      $region54: #{tpu_custom_call.1} parent=5 // pred_check_branch
        %328 = sbr.rel (%p325) target = $region56
      $region55: #{tpu_custom_call.1} parent=5 // pred_region
        %s329 = ssub.s32 %s22, 1
        %s330 = sand.u32 %s35, 1
        %s331 = scalar_lea.sflag [#allocation3], %s330
        %s332 = sand.u32 %s35, 1
        %s333 = smul.addr %s332, 8
        %s334 = scalar_lea.vmem [#allocation2], %s333
        // Predicated region
        $region57: #{tpu_custom_call.1} parent=55 // pred_check
          %p335 = pneg %p48
        $region58: #{tpu_custom_call.1} parent=55 // pred_check_branch
          %337 = sbr.rel (%p335) target = $region60
        $region59: #{tpu_custom_call.1} parent=55 // pred_region
          %338 = dma.done %s331, 128
        $region60: #{tpu_custom_call.1} parent=55 // pred_fallthru
          _
        // Predicated region
        $region61: #{tpu_custom_call.1} parent=55 // pred_check
          %p339 = pneg %p69
        $region62: #{tpu_custom_call.1} parent=55 // pred_check_branch
          %341 = sbr.rel (%p339) target = $region64
        $region63: #{tpu_custom_call.1} parent=55 // pred_region
          %342 = dma.done [#allocation6], 6144
        $region64: #{tpu_custom_call.1} parent=55 // pred_fallthru
          _
        // Predicated region
        $region65: #{tpu_custom_call.1} parent=55 // pred_check
          %p343 = pneg %p111
        $region66: #{tpu_custom_call.1} parent=55 // pred_check_branch
          %345 = sbr.rel (%p343) target = $region68
        $region67: #{tpu_custom_call.1} parent=55 // pred_region
          %346 = dma.done [#allocation6], 512
        $region68: #{tpu_custom_call.1} parent=55 // pred_fallthru
          _
        %s347 = sand.u32 %s35, 1
        %s348 = scalar_lea.sflag [#allocation3], %s347
        %s349 = sand.u32 %s35, 1
        %s350 = smul.addr %s349, 8
        %s351 = scalar_lea.vmem [#allocation2], %s350
        %p352 = pneg %p48
        %p353 = pneg %p45
        %p354 = pneg %p69
        %p355 = pneg %p66
        %p356 = pneg %p90
        %p357 = pneg %p87
        %p358 = pneg %p111
        %p359 = pneg %p108
        %p360 = pneg %p132
        %p361 = pneg %p129
        %p362 = pneg %p153
        %p363 = pneg %p150
        %p364 = pneg %p174
        %p365 = pneg %p171
        %p366 = pneg %p195
        %p367 = pneg %p192
        %p368 = pneg %p216
        %p369 = pneg %p213
        %p370 = pneg %p242
        %p371 = pneg %p239
        %s372 = sand.u32 %s229, 1
        %s373 = scalar_lea.sflag [#allocation4], %s372
        %s374 = sand.u32 %s229, 1
        %s375 = smul.addr %s374, 8
        %s376 = scalar_lea.vmem [#allocation8], %s375
        %v377 = vld [vmem:[%s334] sm:$0xff]
        %v378 = vld [vmem:[%s5] sm:$0x1]
        %v379 = vld [vmem:[%s6] sm:$0x1]
        %vm380 = vcmask 523264
        %v381 = vsel %vm380, %v377, 0.0
        %382 = vadd.xlane.f32.xlu0 %v381
        %v383 = vpop.xlane.xlu0 %382
        %v384 = vrcp.pop 64.0
        %v385 = vmul.f32 %v383, %v384
        %v386 = vsub.f32 %v377, %v385
        %v387 = vmul.f32 %v386, %v386
        %v388 = vsel %vm380, %v387, 0.0
        %389 = vadd.xlane.f32.xlu0 %v388
        %v390 = vpop.xlane.xlu0 %389
        %v391 = vmul.f32 %v390, %v384
        %v392 = vadd.f32 %v391, 1e-05
        %v393 = vrsqrt.pop %v392
        %v394 = vmul.f32 %v386, %v393
        %v396 = vlaneseq
        %v397 = vshrl.u32 %v396, 7
        %v398 = vsub.s32 0, %v397
        %v399 = vrot.slane %v378, %v398
        %v401 = vmul.f32 %v394, %v399
        %v403 = vlaneseq
        %v404 = vshrl.u32 %v403, 7
        %v405 = vsub.s32 0, %v404
        %v406 = vrot.slane %v379, %v405
        %v408 = vadd.f32 %v401, %v406
        %v409 = vld [vmem:[#allocation5] sm:$0xff]
        %v410 = vld [vmem:[#allocation5 + $0x8] sm:$0xff]
        %v411 = vld [vmem:[#allocation5 + $0x10] sm:$0xff]
        %v412 = vld [vmem:[#allocation5 + $0x18] sm:$0xff]
        %v413 = vld [vmem:[#allocation5 + $0x20] sm:$0xff]
        %v414 = vld [vmem:[#allocation5 + $0x28] sm:$0xff]
        %v415 = vld [vmem:[#allocation5 + $0x30] sm:$0xff]
        %v416 = vld [vmem:[#allocation5 + $0x38] sm:$0xff]
        %v417 = vld [vmem:[#allocation5 + $0x40] sm:$0xff]
        %v418 = vld [vmem:[#allocation5 + $0x48] sm:$0xff]
        %v419 = vld [vmem:[#allocation5 + $0x50] sm:$0xff]
        %v420 = vld [vmem:[#allocation5 + $0x58] sm:$0xff]
        %v421 = vld [vmem:[#allocation5 + $0x60] sm:$0xff]
        %v422 = vld [vmem:[#allocation5 + $0x68] sm:$0xff]
        %v423 = vld [vmem:[#allocation5 + $0x70] sm:$0xff]
        %v424 = vld [vmem:[#allocation5 + $0x78] sm:$0xff]
        %v425 = vld [vmem:[#allocation5 + $0x80] sm:$0xff]
        %v426 = vld [vmem:[#allocation5 + $0x88] sm:$0xff]
        %v427 = vld [vmem:[#allocation5 + $0x90] sm:$0xff]
        %v428 = vld [vmem:[#allocation5 + $0x98] sm:$0xff]
        %v429 = vld [vmem:[#allocation5 + $0xa0] sm:$0xff]
        %v430 = vld [vmem:[#allocation5 + $0xa8] sm:$0xff]
        %v431 = vld [vmem:[#allocation5 + $0xb0] sm:$0xff]
        %v432 = vld [vmem:[#allocation5 + $0xb8] sm:$0xff]
        %v433 = vld [vmem:[#allocation5 + $0xc0] sm:$0xff]
        %v434 = vld [vmem:[#allocation5 + $0xc8] sm:$0xff]
        %v435 = vld [vmem:[#allocation5 + $0xd0] sm:$0xff]
        %v436 = vld [vmem:[#allocation5 + $0xd8] sm:$0xff]
        %v437 = vld [vmem:[#allocation5 + $0xe0] sm:$0xff]
        %v438 = vld [vmem:[#allocation5 + $0xe8] sm:$0xff]
        %v439 = vld [vmem:[#allocation5 + $0xf0] sm:$0xff]
        %v440 = vld [vmem:[#allocation5 + $0xf8] sm:$0xff]
        %v441 = vld [vmem:[#allocation5 + $0x100] sm:$0xff]
        %v442 = vld [vmem:[#allocation5 + $0x108] sm:$0xff]
        %v443 = vld [vmem:[#allocation5 + $0x110] sm:$0xff]
        %v444 = vld [vmem:[#allocation5 + $0x118] sm:$0xff]
        %v445 = vld [vmem:[#allocation5 + $0x120] sm:$0xff]
        %v446 = vld [vmem:[#allocation5 + $0x128] sm:$0xff]
        %v447 = vld [vmem:[#allocation5 + $0x130] sm:$0xff]
        %v448 = vld [vmem:[#allocation5 + $0x138] sm:$0xff]
        %v449 = vld [vmem:[#allocation5 + $0x140] sm:$0xff]
        %v450 = vld [vmem:[#allocation5 + $0x148] sm:$0xff]
        %v451 = vld [vmem:[#allocation5 + $0x150] sm:$0xff]
        %v452 = vld [vmem:[#allocation5 + $0x158] sm:$0xff]
        %v453 = vld [vmem:[#allocation5 + $0x160] sm:$0xff]
        %v454 = vld [vmem:[#allocation5 + $0x168] sm:$0xff]
        %v455 = vld [vmem:[#allocation5 + $0x170] sm:$0xff]
        %v456 = vld [vmem:[#allocation5 + $0x178] sm:$0xff]
        %v457 = vld [vmem:[%s2] sm:$0x3f]
        %v459 = vlaneseq
        %v460 = vshrl.u32 %v459, 7
        %v461 = vsub.s32 0, %v460
        %v462 = vrot.slane %v457, %v461
        %v463 = vlaneseq
        %v464 = vshrl.u32 %v463, 7
        %v465 = vsub.s32 1, %v464
        %v466 = vrot.slane %v457, %v465
        %v467 = vlaneseq
        %v468 = vshrl.u32 %v467, 7
        %v469 = vsub.s32 2, %v468
        %v470 = vrot.slane %v457, %v469
        %v471 = vlaneseq
        %v472 = vshrl.u32 %v471, 7
        %v473 = vsub.s32 3, %v472
        %v474 = vrot.slane %v457, %v473
        %v475 = vlaneseq
        %v476 = vshrl.u32 %v475, 7
        %v477 = vsub.s32 4, %v476
        %v478 = vrot.slane %v457, %v477
        %v479 = vlaneseq
        %v480 = vshrl.u32 %v479, 7
        %v481 = vsub.s32 5, %v480
        %v482 = vrot.slane %v457, %v481
        %v490 = vsel %vm380, %v408, 0
        %492 = vmatprep.subr.mxu0 %v410
        %493 = vmatpush1.msra.mxu0 %v409
        %494 = vmatprep.subr.mxu0 %v416
        %495 = vmatpush1.msra.mxu0 %v415
        %496 = vmatprep.subr.mxu0 %v422
        %497 = vmatpush1.msra.mxu0 %v421
        %498 = vmatprep.subr.mxu0 %v428
        %499 = vmatpush1.msra.mxu0 %v427
        %500 = vmatprep.subr.mxu0 %v434
        %501 = vmatpush1.msra.mxu0 %v433
        %502 = vmatprep.subr.mxu0 %v440
        %503 = vmatpush1.msra.mxu0 %v439
        %504 = vmatprep.subr.mxu0 %v446
        %505 = vmatpush1.msra.mxu0 %v445
        %506 = vmatprep.subr.mxu0 %v452
        %507 = vmatpush1.msra.mxu0 %v451
        %508 = vmatprep.subr.mxu0 0.0
        %509 = vmatpush1.msra.mxu0 0.0
        %510 = vmatprep.subr.mxu0 0.0
        %511 = vmatpush1.msra.mxu0 0.0
        %512 = vmatprep.subr.mxu0 0.0
        %513 = vmatpush1.msra.mxu0 0.0
        %514 = vmatprep.subr.mxu0 0.0
        %515 = vmatpush1.msra.mxu0 0.0
        %516 = vmatprep.subr.mxu0 0.0
        %517 = vmatpush1.msra.mxu0 0.0
        %518 = vmatprep.subr.mxu0 0.0
        %519 = vmatpush1.msra.mxu0 0.0
        %520 = vmatprep.subr.mxu0 0.0
        %521 = vmatpush1.msra.mxu0 0.0
        %522 = vmatprep.subr.mxu0 0.0
        %523 = vmatpush1.msra.mxu0 0.0
        %524 = vmatprep.subr.mxu0 0.0
        %525 = vmatpush1.msra.mxu0 0.0
        %526 = vmatprep.subr.mxu0 0.0
        %527 = vmatpush1.msra.mxu0 0.0
        %528 = vmatprep.subr.mxu0 0.0
        %529 = vmatpush1.msra.mxu0 0.0
        %530 = vmatprep.subr.mxu0 0.0
        %531 = vmatpush1.msra.mxu0 0.0
        %532 = vmatprep.subr.mxu0 0.0
        %533 = vmatpush1.msra.mxu0 0.0
        %534 = vmatprep.subr.mxu0 0.0
        %535 = vmatpush1.msra.mxu0 0.0
        %536 = vmatprep.subr.mxu0 0.0
        %537 = vmatpush1.msra.mxu0 0.0
        %538 = vmatprep.subr.mxu0 0.0
        %539 = vmatpush1.msra.mxu0 0.0
        %540 = vmatprep.subr.mxu0 0.0
        %541 = vmatpush1.msra.mxu0 0.0
        %542 = vmatprep.subr.mxu0 0.0
        %543 = vmatpush1.msra.mxu0 0.0
        %544 = vmatprep.subr.mxu0 0.0
        %545 = vmatpush1.msra.mxu0 0.0
        %546 = vmatprep.subr.mxu0 0.0
        %547 = vmatpush1.msra.mxu0 0.0
        %548 = vmatprep.subr.mxu0 0.0
        %549 = vmatpush1.msra.mxu0 0.0
        %550 = vmatprep.subr.mxu0 0.0
        %551 = vmatpush1.msra.mxu0 0.0
        %552 = vmatprep.subr.mxu0 0.0
        %553 = vmatpush1.msra.mxu0 0.0
        %554 = vmatprep.subr.mxu0 0.0
        %555 = vmatpush1.msra.mxu0 0.0
        %556 = vmatprep.mubr.f32.mxu0 0.0
        %557 = vmatmul.mubr.f32.gmra.mrb[0].mxu0 %v490
        %v558 = vpop.f32.mrb[0].mxu0
        %v559 = vadd.f32 %v462, %v558
        %v560 = vpop.f32.mrb[0].mxu0
        %v561 = vadd.f32 %v466, %v560
        %562 = vdwg.mxu0
        %563 = vmatprep.subr.mxu0 %v412
        %564 = vmatpush1.msra.mxu0 %v411
        %565 = vmatprep.subr.mxu0 %v418
        %566 = vmatpush1.msra.mxu0 %v417
        %567 = vmatprep.subr.mxu0 %v424
        %568 = vmatpush1.msra.mxu0 %v423
        %569 = vmatprep.subr.mxu0 %v430
        %570 = vmatpush1.msra.mxu0 %v429
        %571 = vmatprep.subr.mxu0 %v436
        %572 = vmatpush1.msra.mxu0 %v435
        %573 = vmatprep.subr.mxu0 %v442
        %574 = vmatpush1.msra.mxu0 %v441
        %575 = vmatprep.subr.mxu0 %v448
        %576 = vmatpush1.msra.mxu0 %v447
        %577 = vmatprep.subr.mxu0 %v454
        %578 = vmatpush1.msra.mxu0 %v453
        %579 = vmatprep.subr.mxu0 0.0
        %580 = vmatpush1.msra.mxu0 0.0
        %581 = vmatprep.subr.mxu0 0.0
        %582 = vmatpush1.msra.mxu0 0.0
        %583 = vmatprep.subr.mxu0 0.0
        %584 = vmatpush1.msra.mxu0 0.0
        %585 = vmatprep.subr.mxu0 0.0
        %586 = vmatpush1.msra.mxu0 0.0
        %587 = vmatprep.subr.mxu0 0.0
        %588 = vmatpush1.msra.mxu0 0.0
        %589 = vmatprep.subr.mxu0 0.0
        %590 = vmatpush1.msra.mxu0 0.0
        %591 = vmatprep.subr.mxu0 0.0
        %592 = vmatpush1.msra.mxu0 0.0
        %593 = vmatprep.subr.mxu0 0.0
        %594 = vmatpush1.msra.mxu0 0.0
        %595 = vmatprep.subr.mxu0 0.0
        %596 = vmatpush1.msra.mxu0 0.0
        %597 = vmatprep.subr.mxu0 0.0
        %598 = vmatpush1.msra.mxu0 0.0
        %599 = vmatprep.subr.mxu0 0.0
        %600 = vmatpush1.msra.mxu0 0.0
        %601 = vmatprep.subr.mxu0 0.0
        %602 = vmatpush1.msra.mxu0 0.0
        %603 = vmatprep.subr.mxu0 0.0
        %604 = vmatpush1.msra.mxu0 0.0
        %605 = vmatprep.subr.mxu0 0.0
        %606 = vmatpush1.msra.mxu0 0.0
        %607 = vmatprep.subr.mxu0 0.0
        %608 = vmatpush1.msra.mxu0 0.0
        %609 = vmatprep.subr.mxu0 0.0
        %610 = vmatpush1.msra.mxu0 0.0
        %611 = vmatprep.subr.mxu0 0.0
        %612 = vmatpush1.msra.mxu0 0.0
        %613 = vmatprep.subr.mxu0 0.0
        %614 = vmatpush1.msra.mxu0 0.0
        %615 = vmatprep.subr.mxu0 0.0
        %616 = vmatpush1.msra.mxu0 0.0
        %617 = vmatprep.subr.mxu0 0.0
        %618 = vmatpush1.msra.mxu0 0.0
        %619 = vmatprep.subr.mxu0 0.0
        %620 = vmatpush1.msra.mxu0 0.0
        %621 = vmatprep.subr.mxu0 0.0
        %622 = vmatpush1.msra.mxu0 0.0
        %623 = vmatprep.subr.mxu0 0.0
        %624 = vmatpush1.msra.mxu0 0.0
        %625 = vmatprep.subr.mxu0 0.0
        %626 = vmatpush1.msra.mxu0 0.0
        %627 = vmatprep.mubr.f32.mxu0 0.0
        %628 = vmatmul.mubr.f32.gmra.mrb[0].mxu0 %v490
        %v629 = vpop.f32.mrb[0].mxu0
        %v630 = vadd.f32 %v470, %v629
        %v631 = vpop.f32.mrb[0].mxu0
        %v632 = vadd.f32 %v474, %v631
        %633 = vdwg.mxu0
        %634 = vmatprep.subr.mxu0 %v414
        %635 = vmatpush1.msra.mxu0 %v413
        %636 = vmatprep.subr.mxu0 %v420
        %637 = vmatpush1.msra.mxu0 %v419
        %638 = vmatprep.subr.mxu0 %v426
        %639 = vmatpush1.msra.mxu0 %v425
        %640 = vmatprep.subr.mxu0 %v432
        %641 = vmatpush1.msra.mxu0 %v431
        %642 = vmatprep.subr.mxu0 %v438
        %643 = vmatpush1.msra.mxu0 %v437
        %644 = vmatprep.subr.mxu0 %v444
        %645 = vmatpush1.msra.mxu0 %v443
        %646 = vmatprep.subr.mxu0 %v450
        %647 = vmatpush1.msra.mxu0 %v449
        %648 = vmatprep.subr.mxu0 %v456
        %649 = vmatpush1.msra.mxu0 %v455
        %650 = vmatprep.subr.mxu0 0.0
        %651 = vmatpush1.msra.mxu0 0.0
        %652 = vmatprep.subr.mxu0 0.0
        %653 = vmatpush1.msra.mxu0 0.0
        %654 = vmatprep.subr.mxu0 0.0
        %655 = vmatpush1.msra.mxu0 0.0
        %656 = vmatprep.subr.mxu0 0.0
        %657 = vmatpush1.msra.mxu0 0.0
        %658 = vmatprep.subr.mxu0 0.0
        %659 = vmatpush1.msra.mxu0 0.0
        %660 = vmatprep.subr.mxu0 0.0
        %661 = vmatpush1.msra.mxu0 0.0
        %662 = vmatprep.subr.mxu0 0.0
        %663 = vmatpush1.msra.mxu0 0.0
        %664 = vmatprep.subr.mxu0 0.0
        %665 = vmatpush1.msra.mxu0 0.0
        %666 = vmatprep.subr.mxu0 0.0
        %667 = vmatpush1.msra.mxu0 0.0
        %668 = vmatprep.subr.mxu0 0.0
        %669 = vmatpush1.msra.mxu0 0.0
        %670 = vmatprep.subr.mxu0 0.0
        %671 = vmatpush1.msra.mxu0 0.0
        %672 = vmatprep.subr.mxu0 0.0
        %673 = vmatpush1.msra.mxu0 0.0
        %674 = vmatprep.subr.mxu0 0.0
        %675 = vmatpush1.msra.mxu0 0.0
        %676 = vmatprep.subr.mxu0 0.0
        %677 = vmatpush1.msra.mxu0 0.0
        %678 = vmatprep.subr.mxu0 0.0
        %679 = vmatpush1.msra.mxu0 0.0
        %680 = vmatprep.subr.mxu0 0.0
        %681 = vmatpush1.msra.mxu0 0.0
        %682 = vmatprep.subr.mxu0 0.0
        %683 = vmatpush1.msra.mxu0 0.0
        %684 = vmatprep.subr.mxu0 0.0
        %685 = vmatpush1.msra.mxu0 0.0
        %686 = vmatprep.subr.mxu0 0.0
        %687 = vmatpush1.msra.mxu0 0.0
        %688 = vmatprep.subr.mxu0 0.0
        %689 = vmatpush1.msra.mxu0 0.0
        %690 = vmatprep.subr.mxu0 0.0
        %691 = vmatpush1.msra.mxu0 0.0
        %692 = vmatprep.subr.mxu0 0.0
        %693 = vmatpush1.msra.mxu0 0.0
        %694 = vmatprep.subr.mxu0 0.0
        %695 = vmatpush1.msra.mxu0 0.0
        %696 = vmatprep.subr.mxu0 0.0
        %697 = vmatpush1.msra.mxu0 0.0
        %698 = vmatprep.mubr.f32.mxu0 0.0
        %699 = vmatmul.mubr.f32.gmra.mrb[0].mxu0 %v490
        %v700 = vpop.f32.mrb[0].mxu0
        %v701 = vadd.f32 %v478, %v700
        %v702 = vpop.f32.mrb[0].mxu0
        %v703 = vadd.f32 %v482, %v702
        %704 = vdwg.mxu0
        %vm705 = vcmask 130048
        %v707 = vsel %vm705, %v559, 0
        %v710 = vsel %vm705, %v630, 0
        %712 = vmatprep.subr.mxu0 0.0
        %713 = vmatpush1.xpose.msra.mxu0 %v710
        %714 = vmatprep.subr.mxu0 0.0
        %715 = vmatpush1.xpose.msra.mxu0 0.0
        %716 = vmatprep.subr.mxu0 0.0
        %717 = vmatpush1.xpose.msra.mxu0 0.0
        %718 = vmatprep.subr.mxu0 0.0
        %719 = vmatpush1.xpose.msra.mxu0 0.0
        %720 = vmatprep.subr.mxu0 0.0
        %721 = vmatpush1.xpose.msra.mxu0 0.0
        %722 = vmatprep.subr.mxu0 0.0
        %723 = vmatpush1.xpose.msra.mxu0 0.0
        %724 = vmatprep.subr.mxu0 0.0
        %725 = vmatpush1.xpose.msra.mxu0 0.0
        %726 = vmatprep.subr.mxu0 0.0
        %727 = vmatpush1.xpose.msra.mxu0 0.0
        %728 = vmatprep.subr.mxu0 0.0
        %729 = vmatpush1.xpose.msra.mxu0 0.0
        %730 = vmatprep.subr.mxu0 0.0
        %731 = vmatpush1.xpose.msra.mxu0 0.0
        %732 = vmatprep.subr.mxu0 0.0
        %733 = vmatpush1.xpose.msra.mxu0 0.0
        %734 = vmatprep.subr.mxu0 0.0
        %735 = vmatpush1.xpose.msra.mxu0 0.0
        %736 = vmatprep.subr.mxu0 0.0
        %737 = vmatpush1.xpose.msra.mxu0 0.0
        %738 = vmatprep.subr.mxu0 0.0
        %739 = vmatpush1.xpose.msra.mxu0 0.0
        %740 = vmatprep.subr.mxu0 0.0
        %741 = vmatpush1.xpose.msra.mxu0 0.0
        %742 = vmatprep.subr.mxu0 0.0
        %743 = vmatpush1.xpose.msra.mxu0 0.0
        %744 = vmatprep.subr.mxu0 0.0
        %745 = vmatpush1.xpose.msra.mxu0 0.0
        %746 = vmatprep.subr.mxu0 0.0
        %747 = vmatpush1.xpose.msra.mxu0 0.0
        %748 = vmatprep.subr.mxu0 0.0
        %749 = vmatpush1.xpose.msra.mxu0 0.0
        %750 = vmatprep.subr.mxu0 0.0
        %751 = vmatpush1.xpose.msra.mxu0 0.0
        %752 = vmatprep.subr.mxu0 0.0
        %753 = vmatpush1.xpose.msra.mxu0 0.0
        %754 = vmatprep.subr.mxu0 0.0
        %755 = vmatpush1.xpose.msra.mxu0 0.0
        %756 = vmatprep.subr.mxu0 0.0
        %757 = vmatpush1.xpose.msra.mxu0 0.0
        %758 = vmatprep.subr.mxu0 0.0
        %759 = vmatpush1.xpose.msra.mxu0 0.0
        %760 = vmatprep.subr.mxu0 0.0
        %761 = vmatpush1.xpose.msra.mxu0 0.0
        %762 = vmatprep.subr.mxu0 0.0
        %763 = vmatpush1.xpose.msra.mxu0 0.0
        %764 = vmatprep.subr.mxu0 0.0
        %765 = vmatpush1.xpose.msra.mxu0 0.0
        %766 = vmatprep.subr.mxu0 0.0
        %767 = vmatpush1.xpose.msra.mxu0 0.0
        %768 = vmatprep.subr.mxu0 0.0
        %769 = vmatpush1.xpose.msra.mxu0 0.0
        %770 = vmatprep.subr.mxu0 0.0
        %771 = vmatpush1.xpose.msra.mxu0 0.0
        %772 = vmatprep.subr.mxu0 0.0
        %773 = vmatpush1.xpose.msra.mxu0 0.0
        %774 = vmatprep.subr.mxu0 0.0
        %775 = vmatpush1.xpose.msra.mxu0 0.0
        %776 = vmatprep.mubr.f32.mxu0 0.0
        %777 = vmatmul.mubr.f32.gmra.mrb[0].mxu0 %v707
        %v778 = vpop.f32.mrb[0].mxu0
        %v779 = vadd.f32 0.0, %v778
        %v780 = vpop.f32.mrb[0].mxu0
        %781 = vdwg.mxu0
        %v783 = vsel %vm705, %v561, 0
        %v786 = vsel %vm705, %v632, 0
        %788 = vmatprep.subr.mxu0 0.0
        %789 = vmatpush1.xpose.msra.mxu0 %v786
        %790 = vmatprep.subr.mxu0 0.0
        %791 = vmatpush1.xpose.msra.mxu0 0.0
        %792 = vmatprep.subr.mxu0 0.0
        %793 = vmatpush1.xpose.msra.mxu0 0.0
        %794 = vmatprep.subr.mxu0 0.0
        %795 = vmatpush1.xpose.msra.mxu0 0.0
        %796 = vmatprep.subr.mxu0 0.0
        %797 = vmatpush1.xpose.msra.mxu0 0.0
        %798 = vmatprep.subr.mxu0 0.0
        %799 = vmatpush1.xpose.msra.mxu0 0.0
        %800 = vmatprep.subr.mxu0 0.0
        %801 = vmatpush1.xpose.msra.mxu0 0.0
        %802 = vmatprep.subr.mxu0 0.0
        %803 = vmatpush1.xpose.msra.mxu0 0.0
        %804 = vmatprep.subr.mxu0 0.0
        %805 = vmatpush1.xpose.msra.mxu0 0.0
        %806 = vmatprep.subr.mxu0 0.0
        %807 = vmatpush1.xpose.msra.mxu0 0.0
        %808 = vmatprep.subr.mxu0 0.0
        %809 = vmatpush1.xpose.msra.mxu0 0.0
        %810 = vmatprep.subr.mxu0 0.0
        %811 = vmatpush1.xpose.msra.mxu0 0.0
        %812 = vmatprep.subr.mxu0 0.0
        %813 = vmatpush1.xpose.msra.mxu0 0.0
        %814 = vmatprep.subr.mxu0 0.0
        %815 = vmatpush1.xpose.msra.mxu0 0.0
        %816 = vmatprep.subr.mxu0 0.0
        %817 = vmatpush1.xpose.msra.mxu0 0.0
        %818 = vmatprep.subr.mxu0 0.0
        %819 = vmatpush1.xpose.msra.mxu0 0.0
        %820 = vmatprep.subr.mxu0 0.0
        %821 = vmatpush1.xpose.msra.mxu0 0.0
        %822 = vmatprep.subr.mxu0 0.0
        %823 = vmatpush1.xpose.msra.mxu0 0.0
        %824 = vmatprep.subr.mxu0 0.0
        %825 = vmatpush1.xpose.msra.mxu0 0.0
        %826 = vmatprep.subr.mxu0 0.0
        %827 = vmatpush1.xpose.msra.mxu0 0.0
        %828 = vmatprep.subr.mxu0 0.0
        %829 = vmatpush1.xpose.msra.mxu0 0.0
        %830 = vmatprep.subr.mxu0 0.0
        %831 = vmatpush1.xpose.msra.mxu0 0.0
        %832 = vmatprep.subr.mxu0 0.0
        %833 = vmatpush1.xpose.msra.mxu0 0.0
        %834 = vmatprep.subr.mxu0 0.0
        %835 = vmatpush1.xpose.msra.mxu0 0.0
        %836 = vmatprep.subr.mxu0 0.0
        %837 = vmatpush1.xpose.msra.mxu0 0.0
        %838 = vmatprep.subr.mxu0 0.0
        %839 = vmatpush1.xpose.msra.mxu0 0.0
        %840 = vmatprep.subr.mxu0 0.0
        %841 = vmatpush1.xpose.msra.mxu0 0.0
        %842 = vmatprep.subr.mxu0 0.0
        %843 = vmatpush1.xpose.msra.mxu0 0.0
        %844 = vmatprep.subr.mxu0 0.0
        %845 = vmatpush1.xpose.msra.mxu0 0.0
        %846 = vmatprep.subr.mxu0 0.0
        %847 = vmatpush1.xpose.msra.mxu0 0.0
        %848 = vmatprep.subr.mxu0 0.0
        %849 = vmatpush1.xpose.msra.mxu0 0.0
        %850 = vmatprep.subr.mxu0 0.0
        %851 = vmatpush1.xpose.msra.mxu0 0.0
        %852 = vmatprep.mubr.f32.mxu0 0.0
        %853 = vmatmul.mubr.f32.gmra.mrb[0].mxu0 %v783
        %v854 = vpop.f32.mrb[0].mxu0
        %v855 = vadd.f32 0.0, %v854
        %v856 = vpop.f32.mrb[0].mxu0
        %857 = vdwg.mxu0
        %vm858 = vcmask 64512
        %v859 = vsel %vm858, %v779, -inf
        %860 = vmax.xlane.f32.xlu0 %v859
        %v861 = vpop.xlane.xlu0 %860
        %v862 = vsel %vm858, %v855, -inf
        %863 = vmax.xlane.f32.xlu0 %v862
        %v864 = vpop.xlane.xlu0 %863
        %v865 = vsub.f32 %v779, %v861
        %v866 = vsub.f32 %v855, %v864
        %v867 = vmul.f32 %v865, 1.442695
        %v868 = vpow.pop %v867
        %v869 = vmul.f32 %v866, 1.442695
        %v870 = vpow.pop %v869
        %v871 = vsel %vm858, %v868, 0.0
        %872 = vadd.xlane.f32.xlu0 %v871
        %v873 = vpop.xlane.xlu0 %872
        %v874 = vsel %vm858, %v870, 0.0
        %875 = vadd.xlane.f32.xlu0 %v874
        %v876 = vpop.xlane.xlu0 %875
        %v877 = vadd.f32 %v873, 1.0
        %v878 = vadd.f32 %v876, 1.0
        %v879 = vrcp.pop %v877
        %v880 = vmul.f32 %v868, %v879
        %v881 = vrcp.pop %v878
        %v882 = vmul.f32 %v870, %v881
        %v884 = vsel %vm858, %v880, 0
        %886 = vmatprep.subr.mxu0 0.0
        %887 = vmatpush1.msra.mxu0 %v701
        %888 = vmatprep.subr.mxu0 0.0
        %889 = vmatpush1.msra.mxu0 0.0
        %890 = vmatprep.subr.mxu0 0.0
        %891 = vmatpush1.msra.mxu0 0.0
        %892 = vmatprep.subr.mxu0 0.0
        %893 = vmatpush1.msra.mxu0 0.0
        %894 = vmatprep.subr.mxu0 0.0
        %895 = vmatpush1.msra.mxu0 0.0
        %896 = vmatprep.subr.mxu0 0.0
        %897 = vmatpush1.msra.mxu0 0.0
        %898 = vmatprep.subr.mxu0 0.0
        %899 = vmatpush1.msra.mxu0 0.0
        %900 = vmatprep.subr.mxu0 0.0
        %901 = vmatpush1.msra.mxu0 0.0
        %902 = vmatprep.subr.mxu0 0.0
        %903 = vmatpush1.msra.mxu0 0.0
        %904 = vmatprep.subr.mxu0 0.0
        %905 = vmatpush1.msra.mxu0 0.0
        %906 = vmatprep.subr.mxu0 0.0
        %907 = vmatpush1.msra.mxu0 0.0
        %908 = vmatprep.subr.mxu0 0.0
        %909 = vmatpush1.msra.mxu0 0.0
        %910 = vmatprep.subr.mxu0 0.0
        %911 = vmatpush1.msra.mxu0 0.0
        %912 = vmatprep.subr.mxu0 0.0
        %913 = vmatpush1.msra.mxu0 0.0
        %914 = vmatprep.subr.mxu0 0.0
        %915 = vmatpush1.msra.mxu0 0.0
        %916 = vmatprep.subr.mxu0 0.0
        %917 = vmatpush1.msra.mxu0 0.0
        %918 = vmatprep.subr.mxu0 0.0
        %919 = vmatpush1.msra.mxu0 0.0
        %920 = vmatprep.subr.mxu0 0.0
        %921 = vmatpush1.msra.mxu0 0.0
        %922 = vmatprep.subr.mxu0 0.0
        %923 = vmatpush1.msra.mxu0 0.0
        %924 = vmatprep.subr.mxu0 0.0
        %925 = vmatpush1.msra.mxu0 0.0
        %926 = vmatprep.subr.mxu0 0.0
        %927 = vmatpush1.msra.mxu0 0.0
        %928 = vmatprep.subr.mxu0 0.0
        %929 = vmatpush1.msra.mxu0 0.0
        %930 = vmatprep.subr.mxu0 0.0
        %931 = vmatpush1.msra.mxu0 0.0
        %932 = vmatprep.subr.mxu0 0.0
        %933 = vmatpush1.msra.mxu0 0.0
        %934 = vmatprep.subr.mxu0 0.0
        %935 = vmatpush1.msra.mxu0 0.0
        %936 = vmatprep.subr.mxu0 0.0
        %937 = vmatpush1.msra.mxu0 0.0
        %938 = vmatprep.subr.mxu0 0.0
        %939 = vmatpush1.msra.mxu0 0.0
        %940 = vmatprep.subr.mxu0 0.0
        %941 = vmatpush1.msra.mxu0 0.0
        %942 = vmatprep.subr.mxu0 0.0
        %943 = vmatpush1.msra.mxu0 0.0
        %944 = vmatprep.subr.mxu0 0.0
        %945 = vmatpush1.msra.mxu0 0.0
        %946 = vmatprep.subr.mxu0 0.0
        %947 = vmatpush1.msra.mxu0 0.0
        %948 = vmatprep.subr.mxu0 0.0
        %949 = vmatpush1.msra.mxu0 0.0
        %950 = vmatprep.mubr.f32.mxu0 0.0
        %951 = vmatmul.mubr.f32.gmra.mrb[0].mxu0 %v884
        %v952 = vpop.f32.mrb[0].mxu0
        %v953 = vadd.f32 0.0, %v952
        %v954 = vpop.f32.mrb[0].mxu0
        %955 = vdwg.mxu0
        %v957 = vsel %vm858, %v882, 0
        %959 = vmatprep.subr.mxu0 0.0
        %960 = vmatpush1.msra.mxu0 %v703
        %961 = vmatprep.subr.mxu0 0.0
        %962 = vmatpush1.msra.mxu0 0.0
        %963 = vmatprep.subr.mxu0 0.0
        %964 = vmatpush1.msra.mxu0 0.0
        %965 = vmatprep.subr.mxu0 0.0
        %966 = vmatpush1.msra.mxu0 0.0
        %967 = vmatprep.subr.mxu0 0.0
        %968 = vmatpush1.msra.mxu0 0.0
        %969 = vmatprep.subr.mxu0 0.0
        %970 = vmatpush1.msra.mxu0 0.0
        %971 = vmatprep.subr.mxu0 0.0
        %972 = vmatpush1.msra.mxu0 0.0
        %973 = vmatprep.subr.mxu0 0.0
        %974 = vmatpush1.msra.mxu0 0.0
        %975 = vmatprep.subr.mxu0 0.0
        %976 = vmatpush1.msra.mxu0 0.0
        %977 = vmatprep.subr.mxu0 0.0
        %978 = vmatpush1.msra.mxu0 0.0
        %979 = vmatprep.subr.mxu0 0.0
        %980 = vmatpush1.msra.mxu0 0.0
        %981 = vmatprep.subr.mxu0 0.0
        %982 = vmatpush1.msra.mxu0 0.0
        %983 = vmatprep.subr.mxu0 0.0
        %984 = vmatpush1.msra.mxu0 0.0
        %985 = vmatprep.subr.mxu0 0.0
        %986 = vmatpush1.msra.mxu0 0.0
        %987 = vmatprep.subr.mxu0 0.0
        %988 = vmatpush1.msra.mxu0 0.0
        %989 = vmatprep.subr.mxu0 0.0
        %990 = vmatpush1.msra.mxu0 0.0
        %991 = vmatprep.subr.mxu0 0.0
        %992 = vmatpush1.msra.mxu0 0.0
        %993 = vmatprep.subr.mxu0 0.0
        %994 = vmatpush1.msra.mxu0 0.0
        %995 = vmatprep.subr.mxu0 0.0
        %996 = vmatpush1.msra.mxu0 0.0
        %997 = vmatprep.subr.mxu0 0.0
        %998 = vmatpush1.msra.mxu0 0.0
        %999 = vmatprep.subr.mxu0 0.0
        %1000 = vmatpush1.msra.mxu0 0.0
        %1001 = vmatprep.subr.mxu0 0.0
        %1002 = vmatpush1.msra.mxu0 0.0
        %1003 = vmatprep.subr.mxu0 0.0
        %1004 = vmatpush1.msra.mxu0 0.0
        %1005 = vmatprep.subr.mxu0 0.0
        %1006 = vmatpush1.msra.mxu0 0.0
        %1007 = vmatprep.subr.mxu0 0.0
        %1008 = vmatpush1.msra.mxu0 0.0
        %1009 = vmatprep.subr.mxu0 0.0
        %1010 = vmatpush1.msra.mxu0 0.0
        %1011 = vmatprep.subr.mxu0 0.0
        %1012 = vmatpush1.msra.mxu0 0.0
        %1013 = vmatprep.subr.mxu0 0.0
        %1014 = vmatpush1.msra.mxu0 0.0
        %1015 = vmatprep.subr.mxu0 0.0
        %1016 = vmatpush1.msra.mxu0 0.0
        %1017 = vmatprep.subr.mxu0 0.0
        %1018 = vmatpush1.msra.mxu0 0.0
        %1019 = vmatprep.subr.mxu0 0.0
        %1020 = vmatpush1.msra.mxu0 0.0
        %1021 = vmatprep.subr.mxu0 0.0
        %1022 = vmatpush1.msra.mxu0 0.0
        %1023 = vmatprep.mubr.f32.mxu0 0.0
        %1024 = vmatmul.mubr.f32.gmra.mrb[0].mxu0 %v957
        %v1025 = vpop.f32.mrb[0].mxu0
        %v1026 = vadd.f32 0.0, %v1025
        %v1027 = vpop.f32.mrb[0].mxu0
        %1028 = vdwg.mxu0
        %1030 = vrot.lane.b32.xlu0 %v1026, 16
        %v1031 = vpop.permute.xlu0 %1030
        %v1033 = vsel %vm705, %v953, %v1031
        %v1034 = vld [vmem:[%s7] sm:$0x1]
        %v1035 = vld [vmem:[%s8] sm:$0x1]
        %vm1036 = vcmask 261120
        %v1037 = vsel %vm1036, %v1033, 0.0
        %1038 = vadd.xlane.f32.xlu0 %v1037
        %v1039 = vpop.xlane.xlu0 %1038
        %v1040 = vrcp.pop 32.0
        %v1041 = vmul.f32 %v1039, %v1040
        %v1042 = vsub.f32 %v1033, %v1041
        %v1043 = vmul.f32 %v1042, %v1042
        %v1044 = vsel %vm1036, %v1043, 0.0
        %1045 = vadd.xlane.f32.xlu0 %v1044
        %v1046 = vpop.xlane.xlu0 %1045
        %v1047 = vmul.f32 %v1046, %v1040
        %v1048 = vadd.f32 %v1047, 1e-05
        %v1049 = vrsqrt.pop %v1048
        %v1050 = vmul.f32 %v1042, %v1049
        %v1052 = vlaneseq
        %v1053 = vshrl.u32 %v1052, 7
        %v1054 = vsub.s32 0, %v1053
        %v1055 = vrot.slane %v1034, %v1054
        %v1057 = vmul.f32 %v1050, %v1055
        %v1059 = vlaneseq
        %v1060 = vshrl.u32 %v1059, 7
        %v1061 = vsub.s32 0, %v1060
        %v1062 = vrot.slane %v1035, %v1061
        %v1064 = vadd.f32 %v1057, %v1062
        %v1065 = vld [vmem:[#allocation7] sm:$0xff]
        %v1066 = vld [vmem:[#allocation7 + $0x8] sm:$0xff]
        %v1067 = vld [vmem:[#allocation7 + $0x10] sm:$0xff]
        %v1068 = vld [vmem:[#allocation7 + $0x18] sm:$0xff]
        %v1069 = vld [vmem:[%s4] sm:$0x1]
        %v1071 = vlaneseq
        %v1072 = vshrl.u32 %v1071, 7
        %v1073 = vsub.s32 0, %v1072
        %v1074 = vrot.slane %v1069, %v1073
        %v1077 = vsel %vm1036, %v1064, 0
        %1079 = vmatprep.subr.mxu0 0.0
        %1080 = vmatpush1.msra.mxu0 %v1065
        %1081 = vmatprep.subr.mxu0 0.0
        %1082 = vmatpush1.msra.mxu0 %v1066
        %1083 = vmatprep.subr.mxu0 0.0
        %1084 = vmatpush1.msra.mxu0 %v1067
        %1085 = vmatprep.subr.mxu0 0.0
        %1086 = vmatpush1.msra.mxu0 %v1068
        %1087 = vmatprep.subr.mxu0 0.0
        %1088 = vmatpush1.msra.mxu0 0.0
        %1089 = vmatprep.subr.mxu0 0.0
        %1090 = vmatpush1.msra.mxu0 0.0
        %1091 = vmatprep.subr.mxu0 0.0
        %1092 = vmatpush1.msra.mxu0 0.0
        %1093 = vmatprep.subr.mxu0 0.0
        %1094 = vmatpush1.msra.mxu0 0.0
        %1095 = vmatprep.subr.mxu0 0.0
        %1096 = vmatpush1.msra.mxu0 0.0
        %1097 = vmatprep.subr.mxu0 0.0
        %1098 = vmatpush1.msra.mxu0 0.0
        %1099 = vmatprep.subr.mxu0 0.0
        %1100 = vmatpush1.msra.mxu0 0.0
        %1101 = vmatprep.subr.mxu0 0.0
        %1102 = vmatpush1.msra.mxu0 0.0
        %1103 = vmatprep.subr.mxu0 0.0
        %1104 = vmatpush1.msra.mxu0 0.0
        %1105 = vmatprep.subr.mxu0 0.0
        %1106 = vmatpush1.msra.mxu0 0.0
        %1107 = vmatprep.subr.mxu0 0.0
        %1108 = vmatpush1.msra.mxu0 0.0
        %1109 = vmatprep.subr.mxu0 0.0
        %1110 = vmatpush1.msra.mxu0 0.0
        %1111 = vmatprep.subr.mxu0 0.0
        %1112 = vmatpush1.msra.mxu0 0.0
        %1113 = vmatprep.subr.mxu0 0.0
        %1114 = vmatpush1.msra.mxu0 0.0
        %1115 = vmatprep.subr.mxu0 0.0
        %1116 = vmatpush1.msra.mxu0 0.0
        %1117 = vmatprep.subr.mxu0 0.0
        %1118 = vmatpush1.msra.mxu0 0.0
        %1119 = vmatprep.subr.mxu0 0.0
        %1120 = vmatpush1.msra.mxu0 0.0
        %1121 = vmatprep.subr.mxu0 0.0
        %1122 = vmatpush1.msra.mxu0 0.0
        %1123 = vmatprep.subr.mxu0 0.0
        %1124 = vmatpush1.msra.mxu0 0.0
        %1125 = vmatprep.subr.mxu0 0.0
        %1126 = vmatpush1.msra.mxu0 0.0
        %1127 = vmatprep.subr.mxu0 0.0
        %1128 = vmatpush1.msra.mxu0 0.0
        %1129 = vmatprep.subr.mxu0 0.0
        %1130 = vmatpush1.msra.mxu0 0.0
        %1131 = vmatprep.subr.mxu0 0.0
        %1132 = vmatpush1.msra.mxu0 0.0
        %1133 = vmatprep.subr.mxu0 0.0
        %1134 = vmatpush1.msra.mxu0 0.0
        %1135 = vmatprep.subr.mxu0 0.0
        %1136 = vmatpush1.msra.mxu0 0.0
        %1137 = vmatprep.subr.mxu0 0.0
        %1138 = vmatpush1.msra.mxu0 0.0
        %1139 = vmatprep.subr.mxu0 0.0
        %1140 = vmatpush1.msra.mxu0 0.0
        %1141 = vmatprep.subr.mxu0 0.0
        %1142 = vmatpush1.msra.mxu0 0.0
        %1143 = vmatprep.mubr.f32.mxu0 0.0
        %1144 = vmatmul.mubr.f32.gmra.mrb[0].mxu0 %v1077
        %v1145 = vpop.f32.mrb[0].mxu0
        %v1146 = vadd.f32 %v1074, %v1145
        %v1147 = vpop.f32.mrb[0].mxu0
        %1148 = vdwg.mxu0
        %1149 = vst [vmem:[%s376] sm:$0xff] %v1146
        %s1150 = sand.u32 %s229, 1
        %s1151 = scalar_lea.sflag [#allocation4], %s1150
        %s1152 = sand.u32 %s229, 1
        %s1153 = smul.addr %s1152, 8
        %s1154 = scalar_lea.vmem [#allocation8], %s1153
        // Predicated region
        $region69: #{tpu_custom_call.1} parent=55 // pred_check
          %p1155 = pneg %p239
        $region70: #{tpu_custom_call.1} parent=55 // pred_check_branch
          %1157 = sbr.rel (%p1155) target = $region72
        $region71: #{tpu_custom_call.1} parent=55 // pred_region
          %s1159 = ssub.s32 128, 128
          %1160 = vsyncadd %s1151, %s1159
          %s1161 = smul.addr %s27, 128
          %s1162 = scalar_lea.hbm %s9, %s1161
          %s1164 = sshll.u32 %s1154, 4
          %s1165 = int_to_ptr.vmem [resolvable:$true] %s1164
          %1167 = dma.vmem_to_hbm [thread:$0]  %s1165, 128, %s1162, %s1151
        $region72: #{tpu_custom_call.1} parent=55 // pred_fallthru
          _
      $region56: #{tpu_custom_call.1} parent=5 // pred_fallthru
        _
      %p1168 = scmp.le.s32.totalorder 2, %s22
      // Predicated region
      $region73: #{tpu_custom_call.1} parent=5 // pred_check
        %p1169 = pneg %p1168
      $region74: #{tpu_custom_call.1} parent=5 // pred_check_branch
        %1171 = sbr.rel (%p1169) target = $region76
      $region75: #{tpu_custom_call.1} parent=5 // pred_region
        %s1172 = ssub.s32 %s22, 2
        // Predicated region
        $region77: #{tpu_custom_call.1} parent=75 // pred_check
          %p1173 = pneg %p245
        $region78: #{tpu_custom_call.1} parent=75 // pred_check_branch
          %1175 = sbr.rel (%p1173) target = $region80
        $region79: #{tpu_custom_call.1} parent=75 // pred_region
          %s1176 = sand.u32 %s230, 1
          %s1177 = scalar_lea.sflag [#allocation4], %s1176
          %s1178 = sand.u32 %s230, 1
          %s1179 = smul.addr %s1178, 8
          %s1180 = scalar_lea.vmem [#allocation8], %s1179
          %1181 = dma.done %s1177, 128
        $region80: #{tpu_custom_call.1} parent=75 // pred_fallthru
          _
      $region76: #{tpu_custom_call.1} parent=5 // pred_fallthru
        _
    $region6: #{tpu_custom_call.1} parent=1 // loop_footer
      %s26 = sadd.s32 1, %s22
    $region7: #{tpu_custom_call.1} parent=1 // loop_footer_branch
      %21 = sbr.rel target = $region3
    $region8: #{tpu_custom_call.1} parent=1 // loop_exit
      _
    %1182 = vsyncpa [#allocation3], 1
    %s1183 = scalar_lea.sflag [#allocation3], 1
    %1184 = vsyncpa %s1183, 1
    %1185 = vsyncpa [#allocation6], 1
    %1186 = vsyncpa [#allocation4], 1
    %s1187 = scalar_lea.sflag [#allocation4], 1
    %1188 = vsyncpa %s1187, 1

</llo_original>
